<compile_context>
chip_gen: v5e
topology: v5e:2x2
jax: 0.10.0
libtpu: 0.0.40
codegen_flags: <defaults>
</compile_context>

<pallas_src>
import functools
import math

import jax
import jax.numpy as jnp
from jax.experimental import pallas as pl
from jax.experimental.pallas import tpu as pltpu

VMEM_LIMIT = 32 * 1024 * 1024     # explicit scoped-VMEM budget (safe on v5e/v6e/v7x)
BN_EPS = 1e-3
STEM_KPAD = 32                    # pad stem im2col K from 27 -> 32


# --------------------------------------------------------------------------------------
# Helpers
# --------------------------------------------------------------------------------------
def _pick_tile(m, target=512):
    """Largest divisor of m that is <= target and a multiple of 16 (bf16 sublane pack);
    falls back to multiples of 8, then to the full extent."""
    if m <= target:
        return m
    for mod in (16, 8):
        t = target - (target % mod)
        while t >= mod:
            if m % t == 0:
                return t
            t -= mod
    return m


_STRIDED_DS_OK = None


def _strided_ds_supported():
    """Feature-detect strided pl.ds loads on this backend (cheap one-time probe)."""
    global _STRIDED_DS_OK
    if _STRIDED_DS_OK is None:
        def probe(x_ref, o_ref):
            o_ref[0] = x_ref[0, pl.ds(1, 4, stride=2), pl.ds(1, 4, stride=2), :]
        try:
            y = pl.pallas_call(
                probe,
                out_shape=jax.ShapeDtypeStruct((1, 4, 4, 128), jnp.float32),
            )(jnp.ones((1, 9, 9, 128), jnp.float32))
            jax.block_until_ready(y)
            _STRIDED_DS_OK = True
        except Exception:
            _STRIDED_DS_OK = False
    return _STRIDED_DS_OK


# --------------------------------------------------------------------------------------
# Pallas kernels: 1x1 convs (bf16 MXU matmuls, optional fused SE gate / residual)
# --------------------------------------------------------------------------------------
def _mm_kernel(x_ref, w_ref, b_ref, o_ref, *, act):
    acc = jnp.dot(x_ref[0], w_ref[...], preferred_element_type=jnp.float32)
    acc = acc + b_ref[...]
    if act == "silu":
        acc = acc * jax.nn.sigmoid(acc)
    o_ref[0] = acc.astype(o_ref.dtype)


def _mm_gate_kernel(x_ref, g_ref, w_ref, b_ref, o_ref):
    xg = (x_ref[0].astype(jnp.float32) * g_ref[0]).astype(jnp.bfloat16)
    acc = jnp.dot(xg, w_ref[...], preferred_element_type=jnp.float32) + b_ref[...]
    o_ref[0] = acc.astype(o_ref.dtype)


def _mm_gate_res_kernel(x_ref, g_ref, w_ref, b_ref, r_ref, o_ref):
    xg = (x_ref[0].astype(jnp.float32) * g_ref[0]).astype(jnp.bfloat16)
    acc = jnp.dot(xg, w_ref[...], preferred_element_type=jnp.float32) + b_ref[...]
    acc = acc + r_ref[0].astype(jnp.float32)
    o_ref[0] = acc.astype(o_ref.dtype)


def conv1x1(x, w, b, *, act="none", gate=None, residual=None, tile=512):
    """y = act((x [* gate]) @ w + b) [+ residual] on (B, HW, Cin) -> (B, HW, Cout).

    x, w, residual, output: bf16.  gate, b: f32.  Accumulation in f32 on the MXU.
    """
    B, HW, K = x.shape
    N = w.shape[1]
    tm = _pick_tile(HW, tile)
    grid = (B, HW // tm)

    in_specs = [pl.BlockSpec((1, tm, K), lambda bb, i: (bb, i, 0))]
    args = [x]
    if gate is not None:
        in_specs.append(pl.BlockSpec((1, 1, K), lambda bb, i: (bb, 0, 0)))
        args.append(gate)
    in_specs.append(pl.BlockSpec((K, N), lambda bb, i: (0, 0)))
    in_specs.append(pl.BlockSpec((1, N), lambda bb, i: (0, 0)))
    args += [w, b]
    if residual is not None:
        in_specs.append(pl.BlockSpec((1, tm, N), lambda bb, i: (bb, i, 0)))
        args.append(residual)

    if gate is None:
        kern = functools.partial(_mm_kernel, act=act)
    elif residual is None:
        kern = _mm_gate_kernel
    else:
        kern = _mm_gate_res_kernel

    return pl.pallas_call(
        kern,
        grid=grid,
        in_specs=in_specs,
        out_specs=pl.BlockSpec((1, tm, N), lambda bb, i: (bb, i, 0)),
        out_shape=jax.ShapeDtypeStruct((B, HW, N), jnp.bfloat16),
        compiler_params=pltpu.CompilerParams(
            dimension_semantics=("parallel", "parallel"),
            vmem_limit_bytes=VMEM_LIMIT),
    )(*args)


# --------------------------------------------------------------------------------------
# Pallas kernel: depthwise KxK conv + BN bias + SiLU, fused SE average-pool
# --------------------------------------------------------------------------------------
def _dw_kernel(x_ref, w_ref, b_ref, o_ref, p_ref, *, k, stride):
    _, Ho, Wo, C = o_ref.shape
    acc = jnp.zeros((Ho, Wo, C), jnp.float32)
    for di in range(k):
        for dj in range(k):
            if stride == 1:
                patch = x_ref[0, pl.ds(di, Ho), pl.ds(dj, Wo), :]
            else:
                patch = x_ref[0, pl.ds(di, Ho, stride=stride),
                              pl.ds(dj, Wo, stride=stride), :]
            acc = acc + patch.astype(jnp.float32) * w_ref[di, dj, :]
    acc = acc + b_ref[...]
    acc = acc * jax.nn.sigmoid(acc)                  # fused BN bias + SiLU
    o_ref[0] = acc.astype(o_ref.dtype)
    p_ref[...] = (jnp.sum(acc, axis=(0, 1)) * (1.0 / (Ho * Wo)))[None, None, :]


def depthwise_conv_silu_pool(x, w, b, kernel, stride):
    """Returns (y: (B, Ho, Wo, C) bf16, pooled: (B, C) f32)."""
    B, H, W, C = x.shape
    p = (kernel - 1) // 2
    Hp, Wp = H + 2 * p, W + 2 * p
    use_strided = (stride == 1) or _strided_ds_supported()
    s_eff = stride if use_strided else 1
    Ho = (Hp - kernel) // s_eff + 1
    Wo = (Wp - kernel) // s_eff + 1
    # TODO(synk): fold the spatial zero-padding into the kernel (masked loads) to avoid
    # this extra HBM round trip, and add row-halo tiling for very large resolutions.
    xp = jnp.pad(x, ((0, 0), (p, p), (p, p), (0, 0)))

    y, pooled = pl.pallas_call(
        functools.partial(_dw_kernel, k=kernel, stride=s_eff),
        grid=(B,),
        in_specs=[pl.BlockSpec((1, Hp, Wp, C), lambda bb: (bb, 0, 0, 0)),
                  pl.BlockSpec((kernel, kernel, C), lambda bb: (0, 0, 0)),
                  pl.BlockSpec((1, C), lambda bb: (0, 0))],
        out_specs=[pl.BlockSpec((1, Ho, Wo, C), lambda bb: (bb, 0, 0, 0)),
                   pl.BlockSpec((1, 1, C), lambda bb: (bb, 0, 0))],
        out_shape=[jax.ShapeDtypeStruct((B, Ho, Wo, C), jnp.bfloat16),
                   jax.ShapeDtypeStruct((B, 1, C), jnp.float32)],
        compiler_params=pltpu.CompilerParams(
            dimension_semantics=("parallel",), vmem_limit_bytes=VMEM_LIMIT),
    )(xp, w, b)

    if not use_strided:
        # Fallback: stride-s output == stride-1 output subsampled at the same taps.
        y = y[:, ::stride, ::stride, :]
        pooled2d = jnp.mean(y.astype(jnp.float32), axis=(1, 2))
        return y, pooled2d
    return y, pooled.reshape(B, C)


# --------------------------------------------------------------------------------------
# Pallas kernel: squeeze-excitation gate (pool already fused into the depthwise kernel)
# --------------------------------------------------------------------------------------
def _se_gate_kernel(p_ref, w1_ref, b1_ref, w2_ref, b2_ref, o_ref):
    h = jnp.dot(p_ref[...], w1_ref[...], preferred_element_type=jnp.float32) + b1_ref[...]
    h = h * jax.nn.sigmoid(h)                        # SiLU
    g = jnp.dot(h, w2_ref[...], preferred_element_type=jnp.float32) + b2_ref[...]
    o_ref[...] = jax.nn.sigmoid(g)                   # channel gate, applied in project matmul


def se_gate(pooled, w1, b1, w2, b2):
    B, C = pooled.shape
    return pl.pallas_call(
        _se_gate_kernel,
        out_shape=jax.ShapeDtypeStruct((B, C), jnp.float32),
    )(pooled, w1, b1, w2, b2)


# --------------------------------------------------------------------------------------
# EfficientNet-B7 architecture config (torchvision: width_mult=2.0, depth_mult=3.1)
# --------------------------------------------------------------------------------------
def make_divisible(v, divisor=8, min_value=None):
    if min_value is None:
        min_value = divisor
    new_v = max(min_value, int(v + divisor / 2) // divisor * divisor)
    if new_v < 0.9 * v:
        new_v += divisor
    return new_v


def efficientnet_b7_config():
    width_mult, depth_mult = 2.0, 3.1
    base = [
        (1, 3, 1, 32, 16, 1),
        (6, 3, 2, 16, 24, 2),
        (6, 5, 2, 24, 40, 2),
        (6, 3, 2, 40, 80, 3),
        (6, 5, 1, 80, 112, 3),
        (6, 5, 2, 112, 192, 4),
        (6, 3, 1, 192, 320, 1),
    ]
    stages = []
    for er, k, s, ic, oc, n in base:
        ic = make_divisible(ic * width_mult)
        oc = make_divisible(oc * width_mult)
        n = int(math.ceil(n * depth_mult))
        blocks = []
        for i in range(n):
            in_c = ic if i == 0 else oc
            blocks.append(dict(
                expand_ratio=er, kernel=k, stride=s if i == 0 else 1,
                in_c=in_c, out_c=oc,
                exp_c=make_divisible(in_c * er),
                sq_c=max(1, in_c // 4),
            ))
        stages.append(blocks)
    stem_c = make_divisible(32 * width_mult)      # 64
    head_in = make_divisible(320 * width_mult)    # 640
    head_out = 4 * head_in                        # 2560
    return stem_c, stages, head_in, head_out


# --------------------------------------------------------------------------------------
# Deterministic synthetic parameters (BN eval-mode stats folded into conv weights)
# --------------------------------------------------------------------------------------
_KEY = jax.random.PRNGKey(0)
_COUNTER = [0]


def _next_key():
    _COUNTER[0] += 1
    return jax.random.fold_in(_KEY, _COUNTER[0])


def _fold_bn(w, cout):
    kg, kb, km, kv = jax.random.split(_next_key(), 4)
    gamma = 1.0 + 0.1 * jax.random.normal(kg, (cout,), jnp.float32)
    beta = 0.05 * jax.random.normal(kb, (cout,), jnp.float32)
    mean = 0.05 * jax.random.normal(km, (cout,), jnp.float32)
    var = 1.0 + 0.1 * jax.random.uniform(kv, (cout,), jnp.float32)
    scale = gamma * jax.lax.rsqrt(var + BN_EPS)
    return w * scale, beta - mean * scale


def conv_bn_1x1(cin, cout, gain=2.0):
    w = jax.random.normal(_next_key(), (cin, cout), jnp.float32) * math.sqrt(gain / cin)
    w, b = _fold_bn(w, cout)
    return w.astype(jnp.bfloat16), b.reshape(1, cout)


def conv_bn_dw(k, c):
    w = jax.random.normal(_next_key(), (k, k, c), jnp.float32) * math.sqrt(2.0 / (k * k))
    w, b = _fold_bn(w, c)
    return w, b.reshape(1, c)


def conv_bn_stem(cin, cout, k, k_pad):
    fan = k * k * cin
    w = jax.random.normal(_next_key(), (fan, cout), jnp.float32) * math.sqrt(2.0 / fan)
    w, b = _fold_bn(w, cout)
    w = jnp.pad(w, ((0, k_pad - fan), (0, 0)))
    return w.astype(jnp.bfloat16), b.reshape(1, cout)


def fc(cin, cout):
    w = jax.random.normal(_next_key(), (cin, cout), jnp.float32) * math.sqrt(1.0 / cin)
    b = 0.05 * jax.random.normal(_next_key(), (cout,), jnp.float32)
    return w, b.reshape(1, cout)


def init_params(arch):
    stem_c, stages, head_in, head_out = arch
    params = {}
    params["stem_w"], params["stem_b"] = conv_bn_stem(3, stem_c, 3, STEM_KPAD)
    stage_params = []
    for blocks in stages:
        bp = []
        for cfg in blocks:
            p = {}
            if cfg["exp_c"] != cfg["in_c"]:
                p["expand_w"], p["expand_b"] = conv_bn_1x1(cfg["in_c"], cfg["exp_c"], gain=2.0)
            p["dw_w"], p["dw_b"] = conv_bn_dw(cfg["kernel"], cfg["exp_c"])
            p["se_w1"], p["se_b1"] = fc(cfg["exp_c"], cfg["sq_c"])
            p["se_w2"], p["se_b2"] = fc(cfg["sq_c"], cfg["exp_c"])
            p["proj_w"], p["proj_b"] = conv_bn_1x1(cfg["exp_c"], cfg["out_c"], gain=1.0)
            bp.append(p)
        stage_params.append(bp)
    params["stages"] = stage_params
    params["head_w"], params["head_b"] = conv_bn_1x1(head_in, head_out, gain=2.0)
    return params


# --------------------------------------------------------------------------------------
# Forward pass
# --------------------------------------------------------------------------------------
def mbconv(x, cfg, p):
    B, H, W, _ = x.shape
    residual = x
    if "expand_w" in p:                                      # 1x1 expand + BN + SiLU (bf16 MXU)
        h = conv1x1(x.reshape(B, H * W, cfg["in_c"]), p["expand_w"], p["expand_b"], act="silu")
        x = h.reshape(B, H, W, cfg["exp_c"])
    # depthwise KxK + BN + SiLU, with the SE average-pool fused into the same kernel
    y, pooled = depthwise_conv_silu_pool(x, p["dw_w"], p["dw_b"], cfg["kernel"], cfg["stride"])
    B2, H2, W2, Ce = y.shape
    # SE gate (fc1 SiLU -> fc2 sigmoid), tiny kernel on the (B, C_exp) pooled vector
    gate = se_gate(pooled, p["se_w1"], p["se_b1"], p["se_w2"], p["se_b2"]).reshape(B2, 1, Ce)
    # 1x1 project + BN: SE channel gating and residual add fused into the matmul kernel
    use_res = cfg["stride"] == 1 and cfg["in_c"] == cfg["out_c"]
    res = residual.reshape(B2, H2 * W2, cfg["out_c"]) if use_res else None
    out = conv1x1(y.reshape(B2, H2 * W2, Ce), p["proj_w"], p["proj_b"],
                  act="none", gate=gate, residual=res)
    return out.reshape(B2, H2, W2, cfg["out_c"])


def backbone_forward(x_nchw, params, arch):
    stem_c, stages, head_in, head_out = arch
    x = jnp.transpose(x_nchw, (0, 2, 3, 1)).astype(jnp.bfloat16)   # NCHW -> NHWC, bf16
    B, H, W, _ = x.shape

    # stem: 3x3 stride-2 conv + BN + SiLU (im2col glue, K padded 27 -> 32, MXU matmul)
    Ho = (H + 2 - 3) // 2 + 1
    Wo = (W + 2 - 3) // 2 + 1
    xp = jnp.pad(x, ((0, 0), (1, 1), (1, 1), (0, 0)))
    cols = jnp.concatenate(
        [xp[:, di:di + 2 * Ho:2, dj:dj + 2 * Wo:2, :] for di in range(3) for dj in range(3)],
        axis=-1)
    cols = cols.reshape(B, Ho * Wo, 27)
    cols = jnp.pad(cols, ((0, 0), (0, 0), (0, STEM_KPAD - 27)))
    y = conv1x1(cols, params["stem_w"], params["stem_b"], act="silu")
    x = y.reshape(B, Ho, Wo, stem_c)

    # 7 MBConv stages (55 blocks total for B7)
    for blocks, bp in zip(stages, params["stages"]):
        for cfg, p in zip(blocks, bp):
            x = mbconv(x, cfg, p)

    # head: 1x1 conv 640 -> 2560 + BN + SiLU
    B2, H2, W2, C = x.shape
    y = conv1x1(x.reshape(B2, H2 * W2, C), params["head_w"], params["head_b"], act="silu")
    x = y.reshape(B2, H2, W2, head_out)
    return jnp.transpose(x, (0, 3, 1, 2)).astype(jnp.float32)      # NHWC -> NCHW


# --------------------------------------------------------------------------------------
if __name__ == "__main__":
    arch = efficientnet_b7_config()
    params = init_params(arch)

    x = jax.random.normal(jax.random.PRNGKey(0), (2, 3, 64, 64), jnp.float32)
    feats = backbone_forward(x, params, arch)
    feats = jax.block_until_ready(feats)

    assert feats.shape == (2, 2560, 2, 2), feats.shape
    assert bool(jnp.all(jnp.isfinite(feats)))
    print("KERNEL_OK")
</pallas_src>

<mosaic_0001>
module attributes {stable_mosaic.version = 11 : i64} {
  func.func @_mm_kernel(%arg0: i32, %arg1: i32, %arg2: memref<1x512x32xbf16, #tpu.memory_space<vmem>>, %arg3: memref<32x64xbf16, #tpu.memory_space<vmem>>, %arg4: memref<1x64xf32, #tpu.memory_space<vmem>>, %arg5: memref<1x512x64xbf16, #tpu.memory_space<vmem>>) attributes {dimension_semantics = [#tpu.dimension_semantics<parallel>, #tpu.dimension_semantics<parallel>], iteration_bounds = array<i64: 2, 2>, scalar_prefetch = 0 : i64, scratch_operands = 0 : i64, tpu.core_type = #tpu.core_type<tc>, window_params = [{transform_indices = @transform_0, window_bounds = array<i64: 1, 512, 32>}, {pipeline_mode = #tpu.pipeline_mode<synchronous>, transform_indices = @transform_1, window_bounds = array<i64: 32, 64>}, {pipeline_mode = #tpu.pipeline_mode<synchronous>, transform_indices = @transform_2, window_bounds = array<i64: 1, 64>}, {transform_indices = @transform_3, window_bounds = array<i64: 1, 512, 64>}]} {
    %c0 = arith.constant 0 : index
    %c0_0 = arith.constant 0 : index
    %c0_1 = arith.constant 0 : index
    %0 = vector.load %arg2[%c0, %c0_0, %c0_1] : memref<1x512x32xbf16, #tpu.memory_space<vmem>>, vector<1x512x32xbf16>
    %1 = vector.shape_cast %0 : vector<1x512x32xbf16> to vector<512x32xbf16>
    %c0_2 = arith.constant 0 : index
    %c0_3 = arith.constant 0 : index
    %2 = vector.load %arg3[%c0_2, %c0_3] : memref<32x64xbf16, #tpu.memory_space<vmem>>, vector<32x64xbf16>
    %cst = arith.constant dense<0.000000e+00> : vector<512x64xf32>
    %3 = tpu.matmul %1, %2, %cst {dimension_numbers = #tpu.dot_dimension_numbers<[1], [0], [0], [1], [0, 0, 1, 1], [], []>} : vector<512x32xbf16>, vector<32x64xbf16>, vector<512x64xf32> -> vector<512x64xf32>
    %c0_4 = arith.constant 0 : index
    %c0_5 = arith.constant 0 : index
    %4 = vector.load %arg4[%c0_4, %c0_5] : memref<1x64xf32, #tpu.memory_space<vmem>>, vector<1x64xf32>
    %5 = vector.broadcast %4 : vector<1x64xf32> to vector<512x64xf32>
    %6 = arith.addf %3, %5 : vector<512x64xf32>
    %7 = arith.negf %6 : vector<512x64xf32>
    %8 = math.exp %7 : vector<512x64xf32>
    %cst_6 = arith.constant 1.000000e+00 : f32
    %9 = vector.broadcast %cst_6 : f32 to vector<512x64xf32>
    %10 = arith.addf %9, %8 : vector<512x64xf32>
    %11 = arith.divf %9, %10 : vector<512x64xf32>
    %12 = arith.mulf %6, %11 : vector<512x64xf32>
    %13 = arith.truncf %12 : vector<512x64xf32> to vector<512x64xbf16>
    %c0_7 = arith.constant 0 : index
    %c0_8 = arith.constant 0 : index
    %c0_9 = arith.constant 0 : index
    %14 = vector.load %arg5[%c0_7, %c0_8, %c0_9] : memref<1x512x64xbf16, #tpu.memory_space<vmem>>, vector<1x512x64xbf16>
    %15 = vector.shape_cast %14 : vector<1x512x64xbf16> to vector<512x64xbf16>
    %16 = vector.shape_cast %13 : vector<512x64xbf16> to vector<1x512x64xbf16>
    tpu.vector_store %arg5[%c0_7, %c0_8, %c0_9], %16 {strides = array<i32>} : memref<1x512x64xbf16, #tpu.memory_space<vmem>>, vector<1x512x64xbf16>,
    return
  }
  func.func @transform_0(%arg0: i32, %arg1: i32) -> (i32, i32, i32) {
    %c0_i32 = arith.constant 0 : i32
    %c0_i32_0 = arith.constant 0 : i32
    return %arg0, %arg1, %c0_i32 : i32, i32, i32
  }
  func.func @transform_1(%arg0: i32, %arg1: i32) -> (i32, i32) {
    %c0_i32 = arith.constant 0 : i32
    %c0_i32_0 = arith.constant 0 : i32
    %c0_i32_1 = arith.constant 0 : i32
    return %c0_i32, %c0_i32_0 : i32, i32
  }
  func.func @transform_2(%arg0: i32, %arg1: i32) -> (i32, i32) {
    %c0_i32 = arith.constant 0 : i32
    %c0_i32_0 = arith.constant 0 : i32
    %c0_i32_1 = arith.constant 0 : i32
    return %c0_i32, %c0_i32_0 : i32, i32
  }
  func.func @transform_3(%arg0: i32, %arg1: i32) -> (i32, i32, i32) {
    %c0_i32 = arith.constant 0 : i32
    %c0_i32_0 = arith.constant 0 : i32
    return %arg0, %arg1, %c0_i32 : i32, i32, i32
  }
}

</mosaic_0001>

<llo_original>
// kernel: tpu_custom_call.1
$region0: #{tpu_custom_call.1}
  #allocation0 [shape = 'u32[]', space=smem, size = 0x4, offset = 0x4, fixed_abs, tag = 'smem constant byte address 0x4 - core index']
  #allocation1 [shape = 'u32[72,128]{1,0:T(1,128)}', space=vmem, size = 0x9000, scoped, tag = 'internal scratch']
  %s0 = inlined_call_operand.vmem [shape: bf16[2,1024,32], index: 0, kind: input, shape index: {}]
  %s1 = inlined_call_operand.vmem [shape: bf16[32,64], index: 1, kind: input, shape index: {}]
  %s2 = inlined_call_operand.vmem [shape: f32[1,64], index: 2, kind: input, shape index: {}]
  %s3 = inlined_call_operand.vmem [shape: bf16[2,1024,64], index: 3, kind: output, shape index: {}]
  %s4 = sld [smem:[#allocation0]]
  $region45: #{tpu_custom_call.1} parent=0
    _
  %s6 = ssub.s32 1, %s4
  %s7 = scalar_select 0, %s6, %s4
  loop: start=0, step=1, limit=6
  $region2: #{tpu_custom_call.1} parent=0 // loop_pre_header
    _
  $region3: #{tpu_custom_call.1} parent=0 // loop_header
    %s9 = sphi 0, %s13
    %p10 = scmp.ge.s32.totalorder %s9, 6
    %s16 = sphi 0, %s28
    %s17 = sphi 0, %s24
    %s18 = sphi 0, %s16
    %s19 = sphi 0, %s17
    %s20 = sphi 0, %s18
    %s21 = sphi 0, %s19
    %s33 = sphi 0, %s35
    %s36 = sphi 0, %s33
    %s37 = sphi 0, %s36
    %s53 = sphi 0, %s37
    %s57 = sphi 0, %s57
    %s59 = sphi 0, %s57
    %s60 = sphi 0, %s59
    %s74 = sphi 0, %s60
    %s78 = sphi 0, %s78
    %s80 = sphi 0, %s78
    %s81 = sphi 0, %s80
    %s95 = sphi 0, %s81
    %s103 = sphi 0, %s105
    %s106 = sphi 0, %s103
    %s107 = sphi 0, %s106
    %s123 = sphi 0, %s107
  $region4: #{tpu_custom_call.1} parent=0 // loop_header_branch
    %12 = sbr.rel (%p10) target = $region8
  $region5: #{tpu_custom_call.1} parent=0 // loop_body
    %s14 = ssub.s32 %s9, 1
    %s15 = ssub.s32 %s9, 2
    %s22 = sadd.s32 1, %s17
    %p23 = scmp.ge.s32.totalorder %s22, 2
    %s24 = scalar_select %p23, 0, %s22
    %s25 = sadd.s32 1, %s16
    %s26 = scalar_select %p23, %s25, %s16
    %p27 = scmp.ge.s32.totalorder %s26, 2
    %s28 = scalar_select %p27, 0, %s26
    %s29 = ssub.s32 %s16, %s28
    %s30 = ssub.s32 %s17, %s24
    %s31 = sor.u32 %s29, %s30
    %p32 = scmp.eq.s32.totalorder %s31, 0
    %s34 = sadd.s32 %s33, 1
    %s35 = scalar_select %p32, %s33, %s34
    %p38 = pneg %p32
    %p39 = scmp.eq.s32.totalorder %s9, 3
    %p40 = por %p38, %p39
    %p41 = scmp.ne.s32.totalorder %s33, %s36
    %p42 = scmp.eq.s32.totalorder %s9, 0
    %p43 = por %p41, %p42
    %p44 = scmp.ne.s32.totalorder %s33, %s36
    %p45 = scmp.eq.s32.totalorder %s14, 3
    %p46 = por %p44, %p45
    %p47 = scmp.ne.s32.totalorder %s36, %s37
    %p48 = scmp.eq.s32.totalorder %s14, 0
    %p49 = por %p47, %p48
    %p50 = scmp.ne.s32.totalorder %s36, %s37
    %p51 = scmp.eq.s32.totalorder %s15, 3
    %p52 = por %p50, %p51
    %p54 = scmp.ne.s32.totalorder %s37, %s53
    %p55 = scmp.eq.s32.totalorder %s15, 0
    %p56 = por %p54, %p55
    %s58 = sadd.s32 %s57, 1
    %p61 = scmp.eq.s32.totalorder %s9, 3
    %p62 = scmp.ne.s32.totalorder %s57, %s59
    %p63 = scmp.eq.s32.totalorder %s9, 0
    %p64 = por %p62, %p63
    %p65 = scmp.ne.s32.totalorder %s57, %s59
    %p66 = scmp.eq.s32.totalorder %s14, 3
    %p67 = por %p65, %p66
    %p68 = scmp.ne.s32.totalorder %s59, %s60
    %p69 = scmp.eq.s32.totalorder %s14, 0
    %p70 = por %p68, %p69
    %p71 = scmp.ne.s32.totalorder %s59, %s60
    %p72 = scmp.eq.s32.totalorder %s15, 3
    %p73 = por %p71, %p72
    %p75 = scmp.ne.s32.totalorder %s60, %s74
    %p76 = scmp.eq.s32.totalorder %s15, 0
    %p77 = por %p75, %p76
    %s79 = sadd.s32 %s78, 1
    %p82 = scmp.eq.s32.totalorder %s9, 3
    %p83 = scmp.ne.s32.totalorder %s78, %s80
    %p84 = scmp.eq.s32.totalorder %s9, 0
    %p85 = por %p83, %p84
    %p86 = scmp.ne.s32.totalorder %s78, %s80
    %p87 = scmp.eq.s32.totalorder %s14, 3
    %p88 = por %p86, %p87
    %p89 = scmp.ne.s32.totalorder %s80, %s81
    %p90 = scmp.eq.s32.totalorder %s14, 0
    %p91 = por %p89, %p90
    %p92 = scmp.ne.s32.totalorder %s80, %s81
    %p93 = scmp.eq.s32.totalorder %s15, 3
    %p94 = por %p92, %p93
    %p96 = scmp.ne.s32.totalorder %s81, %s95
    %p97 = scmp.eq.s32.totalorder %s15, 0
    %p98 = por %p96, %p97
    %s99 = ssub.s32 %s16, %s28
    %s100 = ssub.s32 %s17, %s24
    %s101 = sor.u32 %s99, %s100
    %p102 = scmp.eq.s32.totalorder %s101, 0
    %s104 = sadd.s32 %s103, 1
    %s105 = scalar_select %p102, %s103, %s104
    %p108 = pneg %p102
    %p109 = scmp.eq.s32.totalorder %s9, 3
    %p110 = por %p108, %p109
    %p111 = scmp.ne.s32.totalorder %s103, %s106
    %p112 = scmp.eq.s32.totalorder %s9, 0
    %p113 = por %p111, %p112
    %p114 = scmp.ne.s32.totalorder %s103, %s106
    %p115 = scmp.eq.s32.totalorder %s14, 3
    %p116 = por %p114, %p115
    %p117 = scmp.ne.s32.totalorder %s106, %s107
    %p118 = scmp.eq.s32.totalorder %s14, 0
    %p119 = por %p117, %p118
    %p120 = scmp.ne.s32.totalorder %s106, %s107
    %p121 = scmp.eq.s32.totalorder %s15, 3
    %p122 = por %p120, %p121
    %p124 = scmp.ne.s32.totalorder %s107, %s123
    %p125 = scmp.eq.s32.totalorder %s15, 0
    %p126 = por %p124, %p125
    %p127 = scmp.le.s32.totalorder 1, %s9
    %p128 = scmp.lt.s32.totalorder %s9, 5
    %p129 = pnand %p127, %p128
    %p130 = pneg %p129
    // Predicated region
    $region9: #{tpu_custom_call.1} parent=5 // pred_check
      _
    $region10: #{tpu_custom_call.1} parent=5 // pred_check_branch
      %132 = sbr.rel (%p129) target = $region12
    $region11: #{tpu_custom_call.1} parent=5 // pred_region
      %s133 = ssub.s32 %s9, 1
      // Predicated region
      $region13: #{tpu_custom_call.1} parent=11 // pred_check
        %p134 = pneg %p70
      $region14: #{tpu_custom_call.1} parent=11 // pred_check_branch
        %136 = sbr.rel (%p134) target = $region16
      $region15: #{tpu_custom_call.1} parent=11 // pred_region
        _
      $region16: #{tpu_custom_call.1} parent=11 // pred_fallthru
        _
      // Predicated region
      $region17: #{tpu_custom_call.1} parent=11 // pred_check
        %p137 = pneg %p91
      $region18: #{tpu_custom_call.1} parent=11 // pred_check_branch
        %139 = sbr.rel (%p137) target = $region20
      $region19: #{tpu_custom_call.1} parent=11 // pred_region
        _
      $region20: #{tpu_custom_call.1} parent=11 // pred_fallthru
        _
    $region12: #{tpu_custom_call.1} parent=5 // pred_fallthru
      _
    %p140 = scmp.lt.s32.totalorder %s9, 4
    // Predicated region
    $region21: #{tpu_custom_call.1} parent=5 // pred_check
      %p141 = pneg %p140
    $region22: #{tpu_custom_call.1} parent=5 // pred_check_branch
      %143 = sbr.rel (%p141) target = $region24
    $region23: #{tpu_custom_call.1} parent=5 // pred_region
      // Predicated region
      $region25: #{tpu_custom_call.1} parent=23 // pred_check
        %p144 = pneg %p43
      $region26: #{tpu_custom_call.1} parent=23 // pred_check_branch
        %146 = sbr.rel (%p144) target = $region28
      $region27: #{tpu_custom_call.1} parent=23 // pred_region
        %s147 = smul.u32 64, %s17
        %p148 = scmp.lt.s32.totalorder %s16, 1
        %s149 = scalar_select %p148, %s16, 1
        %p150 = scmp.lt.s32.totalorder %s147, 127
        %s151 = scalar_select %p150, %s147, 127
        %s152 = smul.addr %s149, 128
        %s153 = sadd.s32 %s151, %s152
        %s154 = smul.addr %s153, 4
        %s155 = scalar_lea.vmem %s0, %s154
        %s156 = smul.u32 64, %s17
      $region28: #{tpu_custom_call.1} parent=23 // pred_fallthru
        _
    $region24: #{tpu_custom_call.1} parent=5 // pred_fallthru
      _
    %p157 = scmp.le.s32.totalorder 1, %s9
    %p158 = scmp.lt.s32.totalorder %s9, 5
    %p159 = pnand %p157, %p158
    %p160 = pneg %p159
    // Predicated region
    $region29: #{tpu_custom_call.1} parent=5 // pred_check
      _
    $region30: #{tpu_custom_call.1} parent=5 // pred_check_branch
      %162 = sbr.rel (%p159) target = $region32
    $region31: #{tpu_custom_call.1} parent=5 // pred_region
      %s163 = ssub.s32 %s9, 1
      %s164 = smul.u32 64, %s19
      %p165 = scmp.lt.s32.totalorder %s18, 1
      %s166 = scalar_select %p165, %s18, 1
      %p167 = scmp.lt.s32.totalorder %s164, 127
      %s168 = scalar_select %p167, %s164, 127
      %s169 = smul.addr %s166, 128
      %s170 = sadd.s32 %s168, %s169
      %s171 = smul.addr %s170, 4
      %s172 = scalar_lea.vmem %s0, %s171
      %p173 = pneg %p49
      %p174 = pneg %p46
      %p175 = pneg %p70
      %p176 = pneg %p67
      %p177 = pneg %p91
      %p178 = pneg %p88
      %p179 = pneg %p119
      %p180 = pneg %p116
      %s181 = smul.u32 64, %s19
      %p182 = scmp.lt.s32.totalorder %s18, 1
      %s183 = scalar_select %p182, %s18, 1
      %p184 = scmp.lt.s32.totalorder %s181, 127
      %s185 = scalar_select %p184, %s181, 127
      %s186 = smul.addr %s183, 128
      %s187 = sadd.s32 %s185, %s186
      %s188 = smul.addr %s187, 4
      %s189 = scalar_lea.vmem %s3, %s188
      %s190 = smul.u32 64, %s19
      %p191 = scmp.lt.s32.totalorder %s18, 1
      %s192 = scalar_select %p191, %s18, 1
      %p193 = scmp.lt.s32.totalorder %s190, 127
      %s194 = scalar_select %p193, %s190, 127
      %s195 = smul.addr %s192, 128
      %s196 = sadd.s32 %s194, %s195
      %s197 = smul.addr %s196, 4
      %s198 = scalar_lea.vmem %s0, %s197
      %s199 = smul.u32 64, %s19
      %s200 = smul.u32 64, %s19
      %p201 = scmp.lt.s32.totalorder %s18, 1
      %s202 = scalar_select %p201, %s18, 1
      %p203 = scmp.lt.s32.totalorder %s200, 127
      %s204 = scalar_select %p203, %s200, 127
      %s205 = smul.addr %s202, 128
      %s206 = sadd.s32 %s204, %s205
      %s207 = smul.addr %s206, 4
      %s208 = scalar_lea.vmem %s3, %s207
      %s209 = smul.u32 64, %s19
      %v211 = vld [vmem:[%s198] sm:$0xf]
      %v212 = vld [vmem:[%s198 + $0x4] sm:$0xf]
      %v213 = vld [vmem:[%s198 + $0x8] sm:$0xf]
      %v214 = vld [vmem:[%s198 + $0xc] sm:$0xf]
      %v215 = vld [vmem:[%s198 + $0x10] sm:$0xf]
      %v216 = vld [vmem:[%s198 + $0x14] sm:$0xf]
      %v217 = vld [vmem:[%s198 + $0x18] sm:$0xf]
      %v218 = vld [vmem:[%s198 + $0x1c] sm:$0xf]
      %v219 = vld [vmem:[%s198 + $0x20] sm:$0xf]
      %v220 = vld [vmem:[%s198 + $0x24] sm:$0xf]
      %v221 = vld [vmem:[%s198 + $0x28] sm:$0xf]
      %v222 = vld [vmem:[%s198 + $0x2c] sm:$0xf]
      %v223 = vld [vmem:[%s198 + $0x30] sm:$0xf]
      %v224 = vld [vmem:[%s198 + $0x34] sm:$0xf]
      %v225 = vld [vmem:[%s198 + $0x38] sm:$0xf]
      %v226 = vld [vmem:[%s198 + $0x3c] sm:$0xf]
      %v227 = vld [vmem:[%s198 + $0x40] sm:$0xf]
      %v228 = vld [vmem:[%s198 + $0x44] sm:$0xf]
      %v229 = vld [vmem:[%s198 + $0x48] sm:$0xf]
      %v230 = vld [vmem:[%s198 + $0x4c] sm:$0xf]
      %v231 = vld [vmem:[%s198 + $0x50] sm:$0xf]
      %v232 = vld [vmem:[%s198 + $0x54] sm:$0xf]
      %v233 = vld [vmem:[%s198 + $0x58] sm:$0xf]
      %v234 = vld [vmem:[%s198 + $0x5c] sm:$0xf]
      %v235 = vld [vmem:[%s198 + $0x60] sm:$0xf]
      %v236 = vld [vmem:[%s198 + $0x64] sm:$0xf]
      %v237 = vld [vmem:[%s198 + $0x68] sm:$0xf]
      %v238 = vld [vmem:[%s198 + $0x6c] sm:$0xf]
      %v239 = vld [vmem:[%s198 + $0x70] sm:$0xf]
      %v240 = vld [vmem:[%s198 + $0x74] sm:$0xf]
      %v241 = vld [vmem:[%s198 + $0x78] sm:$0xf]
      %v242 = vld [vmem:[%s198 + $0x7c] sm:$0xf]
      %v243 = vld [vmem:[%s198 + $0x80] sm:$0xf]
      %v244 = vld [vmem:[%s198 + $0x84] sm:$0xf]
      %v245 = vld [vmem:[%s198 + $0x88] sm:$0xf]
      %v246 = vld [vmem:[%s198 + $0x8c] sm:$0xf]
      %v247 = vld [vmem:[%s198 + $0x90] sm:$0xf]
      %v248 = vld [vmem:[%s198 + $0x94] sm:$0xf]
      %v249 = vld [vmem:[%s198 + $0x98] sm:$0xf]
      %v250 = vld [vmem:[%s198 + $0x9c] sm:$0xf]
      %v251 = vld [vmem:[%s198 + $0xa0] sm:$0xf]
      %v252 = vld [vmem:[%s198 + $0xa4] sm:$0xf]
      %v253 = vld [vmem:[%s198 + $0xa8] sm:$0xf]
      %v254 = vld [vmem:[%s198 + $0xac] sm:$0xf]
      %v255 = vld [vmem:[%s198 + $0xb0] sm:$0xf]
      %v256 = vld [vmem:[%s198 + $0xb4] sm:$0xf]
      %v257 = vld [vmem:[%s198 + $0xb8] sm:$0xf]
      %v258 = vld [vmem:[%s198 + $0xbc] sm:$0xf]
      %v259 = vld [vmem:[%s198 + $0xc0] sm:$0xf]
      %v260 = vld [vmem:[%s198 + $0xc4] sm:$0xf]
      %v261 = vld [vmem:[%s198 + $0xc8] sm:$0xf]
      %v262 = vld [vmem:[%s198 + $0xcc] sm:$0xf]
      %v263 = vld [vmem:[%s198 + $0xd0] sm:$0xf]
      %v264 = vld [vmem:[%s198 + $0xd4] sm:$0xf]
      %v265 = vld [vmem:[%s198 + $0xd8] sm:$0xf]
      %v266 = vld [vmem:[%s198 + $0xdc] sm:$0xf]
      %v267 = vld [vmem:[%s198 + $0xe0] sm:$0xf]
      %v268 = vld [vmem:[%s198 + $0xe4] sm:$0xf]
      %v269 = vld [vmem:[%s198 + $0xe8] sm:$0xf]
      %v270 = vld [vmem:[%s198 + $0xec] sm:$0xf]
      %v271 = vld [vmem:[%s198 + $0xf0] sm:$0xf]
      %v272 = vld [vmem:[%s198 + $0xf4] sm:$0xf]
      %v273 = vld [vmem:[%s198 + $0xf8] sm:$0xf]
      %v274 = vld [vmem:[%s198 + $0xfc] sm:$0xf]
      %v275 = vld [vmem:[%s1] sm:$0xf]
      %v276 = vld [vmem:[%s1 + $0x4] sm:$0xf]
      %v277 = vld [vmem:[%s1 + $0x8] sm:$0xf]
      %v278 = vld [vmem:[%s1 + $0xc] sm:$0xf]
      %v279 = vld [vmem:[%s2] sm:$0x1]
      %v281 = vperm.slane %v279, 0
      %v347 = vunpack.c.l.b16 %v211
      %v348 = vunpack.c.l.b16 %v212
      %v349 = vunpack.c.l.b16 %v213
      %v350 = vunpack.c.l.b16 %v214
      %v351 = vunpack.c.l.b16 %v215
      %v352 = vunpack.c.l.b16 %v216
      %v353 = vunpack.c.l.b16 %v217
      %v354 = vunpack.c.l.b16 %v218
      %v355 = vunpack.c.l.b16 %v219
      %v356 = vunpack.c.l.b16 %v220
      %v357 = vunpack.c.l.b16 %v221
      %v358 = vunpack.c.l.b16 %v222
      %v359 = vunpack.c.l.b16 %v223
      %v360 = vunpack.c.l.b16 %v224
      %v361 = vunpack.c.l.b16 %v225
      %v362 = vunpack.c.l.b16 %v226
      %v363 = vunpack.c.l.b16 %v227
      %v364 = vunpack.c.l.b16 %v228
      %v365 = vunpack.c.l.b16 %v229
      %v366 = vunpack.c.l.b16 %v230
      %v367 = vunpack.c.l.b16 %v231
      %v368 = vunpack.c.l.b16 %v232
      %v369 = vunpack.c.l.b16 %v233
      %v370 = vunpack.c.l.b16 %v234
      %v371 = vunpack.c.l.b16 %v235
      %v372 = vunpack.c.l.b16 %v236
      %v373 = vunpack.c.l.b16 %v237
      %v374 = vunpack.c.l.b16 %v238
      %v375 = vunpack.c.l.b16 %v239
      %v376 = vunpack.c.l.b16 %v240
      %v377 = vunpack.c.l.b16 %v241
      %v378 = vunpack.c.l.b16 %v242
      %v379 = vunpack.c.l.b16 %v243
      %v380 = vunpack.c.l.b16 %v244
      %v381 = vunpack.c.l.b16 %v245
      %v382 = vunpack.c.l.b16 %v246
      %v383 = vunpack.c.l.b16 %v247
      %v384 = vunpack.c.l.b16 %v248
      %v385 = vunpack.c.l.b16 %v249
      %v386 = vunpack.c.l.b16 %v250
      %v387 = vunpack.c.l.b16 %v251
      %v388 = vunpack.c.l.b16 %v252
      %v389 = vunpack.c.l.b16 %v253
      %v390 = vunpack.c.l.b16 %v254
      %v391 = vunpack.c.l.b16 %v255
      %v392 = vunpack.c.l.b16 %v256
      %v393 = vunpack.c.l.b16 %v257
      %v394 = vunpack.c.l.b16 %v258
      %v395 = vunpack.c.l.b16 %v259
      %v396 = vunpack.c.l.b16 %v260
      %v397 = vunpack.c.l.b16 %v261
      %v398 = vunpack.c.l.b16 %v262
      %v399 = vunpack.c.l.b16 %v263
      %v400 = vunpack.c.l.b16 %v264
      %v401 = vunpack.c.l.b16 %v265
      %v402 = vunpack.c.l.b16 %v266
      %v403 = vunpack.c.l.b16 %v267
      %v404 = vunpack.c.l.b16 %v268
      %v405 = vunpack.c.l.b16 %v269
      %v406 = vunpack.c.l.b16 %v270
      %v407 = vunpack.c.l.b16 %v271
      %v408 = vunpack.c.l.b16 %v272
      %v409 = vunpack.c.l.b16 %v273
      %v410 = vunpack.c.l.b16 %v274
      %v411 = vpack.c.b16 %v348, %v347
      %v412 = vpack.c.b16 %v350, %v349
      %v413 = vpack.c.b16 %v352, %v351
      %v414 = vpack.c.b16 %v354, %v353
      %v415 = vpack.c.b16 %v356, %v355
      %v416 = vpack.c.b16 %v358, %v357
      %v417 = vpack.c.b16 %v360, %v359
      %v418 = vpack.c.b16 %v362, %v361
      %v419 = vpack.c.b16 %v364, %v363
      %v420 = vpack.c.b16 %v366, %v365
      %v421 = vpack.c.b16 %v368, %v367
      %v422 = vpack.c.b16 %v370, %v369
      %v423 = vpack.c.b16 %v372, %v371
      %v424 = vpack.c.b16 %v374, %v373
      %v425 = vpack.c.b16 %v376, %v375
      %v426 = vpack.c.b16 %v378, %v377
      %v427 = vpack.c.b16 %v380, %v379
      %v428 = vpack.c.b16 %v382, %v381
      %v429 = vpack.c.b16 %v384, %v383
      %v430 = vpack.c.b16 %v386, %v385
      %v431 = vpack.c.b16 %v388, %v387
      %v432 = vpack.c.b16 %v390, %v389
      %v433 = vpack.c.b16 %v392, %v391
      %v434 = vpack.c.b16 %v394, %v393
      %v435 = vpack.c.b16 %v396, %v395
      %v436 = vpack.c.b16 %v398, %v397
      %v437 = vpack.c.b16 %v400, %v399
      %v438 = vpack.c.b16 %v402, %v401
      %v439 = vpack.c.b16 %v404, %v403
      %v440 = vpack.c.b16 %v406, %v405
      %v441 = vpack.c.b16 %v408, %v407
      %v442 = vpack.c.b16 %v410, %v409
      %v447 = vunpack.c.l.b16 %v275
      %v448 = vunpack.c.l.b16 %v276
      %v449 = vunpack.c.l.b16 %v277
      %v450 = vunpack.c.l.b16 %v278
      %v451 = vpack.c.b16 %v448, %v447
      %v452 = vpack.c.b16 %v450, %v449
      %vm455 = vcmask 261120
      %v457 = vsel %vm455, %v411, 0
      %v460 = vsel %vm455, %v412, 0
      %v463 = vsel %vm455, %v413, 0
      %v466 = vsel %vm455, %v414, 0
      %v469 = vsel %vm455, %v415, 0
      %v472 = vsel %vm455, %v416, 0
      %v475 = vsel %vm455, %v417, 0
      %v478 = vsel %vm455, %v418, 0
      %v481 = vsel %vm455, %v419, 0
      %v484 = vsel %vm455, %v420, 0
      %v487 = vsel %vm455, %v421, 0
      %v490 = vsel %vm455, %v422, 0
      %v493 = vsel %vm455, %v423, 0
      %v496 = vsel %vm455, %v424, 0
      %v499 = vsel %vm455, %v425, 0
      %v502 = vsel %vm455, %v426, 0
      %v505 = vsel %vm455, %v427, 0
      %v508 = vsel %vm455, %v428, 0
      %v511 = vsel %vm455, %v429, 0
      %v514 = vsel %vm455, %v430, 0
      %v517 = vsel %vm455, %v431, 0
      %v520 = vsel %vm455, %v432, 0
      %v523 = vsel %vm455, %v433, 0
      %v526 = vsel %vm455, %v434, 0
      %v529 = vsel %vm455, %v435, 0
      %v532 = vsel %vm455, %v436, 0
      %v535 = vsel %vm455, %v437, 0
      %v538 = vsel %vm455, %v438, 0
      %v541 = vsel %vm455, %v439, 0
      %v544 = vsel %vm455, %v440, 0
      %v547 = vsel %vm455, %v441, 0
      %v550 = vsel %vm455, %v442, 0
      %552 = vmatpush.bf16.msra.mxu0 0
      %553 = vmatpush.bf16.msra.mxu0 0
      %554 = vmatpush.bf16.msra.mxu0 0
      %555 = vmatpush.bf16.msra.mxu0 0
      %556 = vmatpush.bf16.msra.mxu0 0
      %557 = vmatpush.bf16.msra.mxu0 0
      %558 = vmatpush.bf16.msra.mxu0 %v452
      %559 = vmatpush.bf16.msra.mxu0 %v451
      %560 = vmatmul.bf16.gmra.mxu0 %v457
      %v561 = vpop.f32.mrf.mxu0
      %v562 = vadd.f32 %v281, %v561
      %v563 = vpop.f32.mrf.mxu0
      %v564 = vadd.f32 %v281, %v563
      %565 = vmatmul.bf16.gmra.mxu0 %v460
      %v566 = vpop.f32.mrf.mxu0
      %v567 = vadd.f32 %v281, %v566
      %v568 = vpop.f32.mrf.mxu0
      %v569 = vadd.f32 %v281, %v568
      %570 = vmatmul.bf16.gmra.mxu0 %v463
      %v571 = vpop.f32.mrf.mxu0
      %v572 = vadd.f32 %v281, %v571
      %v573 = vpop.f32.mrf.mxu0
      %v574 = vadd.f32 %v281, %v573
      %575 = vmatmul.bf16.gmra.mxu0 %v466
      %v576 = vpop.f32.mrf.mxu0
      %v577 = vadd.f32 %v281, %v576
      %v578 = vpop.f32.mrf.mxu0
      %v579 = vadd.f32 %v281, %v578
      %580 = vmatmul.bf16.gmra.mxu0 %v469
      %v581 = vpop.f32.mrf.mxu0
      %v582 = vadd.f32 %v281, %v581
      %v583 = vpop.f32.mrf.mxu0
      %v584 = vadd.f32 %v281, %v583
      %585 = vmatmul.bf16.gmra.mxu0 %v472
      %v586 = vpop.f32.mrf.mxu0
      %v587 = vadd.f32 %v281, %v586
      %v588 = vpop.f32.mrf.mxu0
      %v589 = vadd.f32 %v281, %v588
      %590 = vmatmul.bf16.gmra.mxu0 %v475
      %v591 = vpop.f32.mrf.mxu0
      %v592 = vadd.f32 %v281, %v591
      %v593 = vpop.f32.mrf.mxu0
      %v594 = vadd.f32 %v281, %v593
      %595 = vmatmul.bf16.gmra.mxu0 %v478
      %v596 = vpop.f32.mrf.mxu0
      %v597 = vadd.f32 %v281, %v596
      %v598 = vpop.f32.mrf.mxu0
      %v599 = vadd.f32 %v281, %v598
      %600 = vmatmul.bf16.gmra.mxu0 %v481
      %v601 = vpop.f32.mrf.mxu0
      %v602 = vadd.f32 %v281, %v601
      %v603 = vpop.f32.mrf.mxu0
      %v604 = vadd.f32 %v281, %v603
      %605 = vmatmul.bf16.gmra.mxu0 %v484
      %v606 = vpop.f32.mrf.mxu0
      %v607 = vadd.f32 %v281, %v606
      %v608 = vpop.f32.mrf.mxu0
      %v609 = vadd.f32 %v281, %v608
      %610 = vmatmul.bf16.gmra.mxu0 %v487
      %v611 = vpop.f32.mrf.mxu0
      %v612 = vadd.f32 %v281, %v611
      %v613 = vpop.f32.mrf.mxu0
      %v614 = vadd.f32 %v281, %v613
      %615 = vmatmul.bf16.gmra.mxu0 %v490
      %v616 = vpop.f32.mrf.mxu0
      %v617 = vadd.f32 %v281, %v616
      %v618 = vpop.f32.mrf.mxu0
      %v619 = vadd.f32 %v281, %v618
      %620 = vmatmul.bf16.gmra.mxu0 %v493
      %v621 = vpop.f32.mrf.mxu0
      %v622 = vadd.f32 %v281, %v621
      %v623 = vpop.f32.mrf.mxu0
      %v624 = vadd.f32 %v281, %v623
      %625 = vmatmul.bf16.gmra.mxu0 %v496
      %v626 = vpop.f32.mrf.mxu0
      %v627 = vadd.f32 %v281, %v626
      %v628 = vpop.f32.mrf.mxu0
      %v629 = vadd.f32 %v281, %v628
      %630 = vmatmul.bf16.gmra.mxu0 %v499
      %v631 = vpop.f32.mrf.mxu0
      %v632 = vadd.f32 %v281, %v631
      %v633 = vpop.f32.mrf.mxu0
      %v634 = vadd.f32 %v281, %v633
      %635 = vmatmul.bf16.gmra.mxu0 %v502
      %v636 = vpop.f32.mrf.mxu0
      %v637 = vadd.f32 %v281, %v636
      %v638 = vpop.f32.mrf.mxu0
      %v639 = vadd.f32 %v281, %v638
      %640 = vmatmul.bf16.gmra.mxu0 %v505
      %v641 = vpop.f32.mrf.mxu0
      %v642 = vadd.f32 %v281, %v641
      %v643 = vpop.f32.mrf.mxu0
      %v644 = vadd.f32 %v281, %v643
      %645 = vmatmul.bf16.gmra.mxu0 %v508
      %v646 = vpop.f32.mrf.mxu0
      %v647 = vadd.f32 %v281, %v646
      %v648 = vpop.f32.mrf.mxu0
      %v649 = vadd.f32 %v281, %v648
      %650 = vmatmul.bf16.gmra.mxu0 %v511
      %v651 = vpop.f32.mrf.mxu0
      %v652 = vadd.f32 %v281, %v651
      %v653 = vpop.f32.mrf.mxu0
      %v654 = vadd.f32 %v281, %v653
      %655 = vmatmul.bf16.gmra.mxu0 %v514
      %v656 = vpop.f32.mrf.mxu0
      %v657 = vadd.f32 %v281, %v656
      %v658 = vpop.f32.mrf.mxu0
      %v659 = vadd.f32 %v281, %v658
      %660 = vmatmul.bf16.gmra.mxu0 %v517
      %v661 = vpop.f32.mrf.mxu0
      %v662 = vadd.f32 %v281, %v661
      %v663 = vpop.f32.mrf.mxu0
      %v664 = vadd.f32 %v281, %v663
      %665 = vmatmul.bf16.gmra.mxu0 %v520
      %v666 = vpop.f32.mrf.mxu0
      %v667 = vadd.f32 %v281, %v666
      %v668 = vpop.f32.mrf.mxu0
      %v669 = vadd.f32 %v281, %v668
      %670 = vmatmul.bf16.gmra.mxu0 %v523
      %v671 = vpop.f32.mrf.mxu0
      %v672 = vadd.f32 %v281, %v671
      %v673 = vpop.f32.mrf.mxu0
      %v674 = vadd.f32 %v281, %v673
      %675 = vmatmul.bf16.gmra.mxu0 %v526
      %v676 = vpop.f32.mrf.mxu0
      %v677 = vadd.f32 %v281, %v676
      %v678 = vpop.f32.mrf.mxu0
      %v679 = vadd.f32 %v281, %v678
      %680 = vmatmul.bf16.gmra.mxu0 %v529
      %v681 = vpop.f32.mrf.mxu0
      %v682 = vadd.f32 %v281, %v681
      %v683 = vpop.f32.mrf.mxu0
      %v684 = vadd.f32 %v281, %v683
      %685 = vmatmul.bf16.gmra.mxu0 %v532
      %v686 = vpop.f32.mrf.mxu0
      %v687 = vadd.f32 %v281, %v686
      %v688 = vpop.f32.mrf.mxu0
      %v689 = vadd.f32 %v281, %v688
      %690 = vmatmul.bf16.gmra.mxu0 %v535
      %v691 = vpop.f32.mrf.mxu0
      %v692 = vadd.f32 %v281, %v691
      %v693 = vpop.f32.mrf.mxu0
      %v694 = vadd.f32 %v281, %v693
      %695 = vmatmul.bf16.gmra.mxu0 %v538
      %v696 = vpop.f32.mrf.mxu0
      %v697 = vadd.f32 %v281, %v696
      %v698 = vpop.f32.mrf.mxu0
      %v699 = vadd.f32 %v281, %v698
      %700 = vmatmul.bf16.gmra.mxu0 %v541
      %v701 = vpop.f32.mrf.mxu0
      %v702 = vadd.f32 %v281, %v701
      %v703 = vpop.f32.mrf.mxu0
      %v704 = vadd.f32 %v281, %v703
      %705 = vmatmul.bf16.gmra.mxu0 %v544
      %v706 = vpop.f32.mrf.mxu0
      %v707 = vadd.f32 %v281, %v706
      %v708 = vpop.f32.mrf.mxu0
      %v709 = vadd.f32 %v281, %v708
      %710 = vmatmul.bf16.gmra.mxu0 %v547
      %v711 = vpop.f32.mrf.mxu0
      %v712 = vadd.f32 %v281, %v711
      %v713 = vpop.f32.mrf.mxu0
      %v714 = vadd.f32 %v281, %v713
      %715 = vmatmul.bf16.gmra.mxu0 %v550
      %v716 = vpop.f32.mrf.mxu0
      %v717 = vadd.f32 %v281, %v716
      %v718 = vpop.f32.mrf.mxu0
      %v719 = vadd.f32 %v281, %v718
      %720 = vdwg.mxu0
      %v721 = vxor.u32 %v562, 2147483648
      %v722 = vxor.u32 %v564, 2147483648
      %v723 = vxor.u32 %v567, 2147483648
      %v724 = vxor.u32 %v569, 2147483648
      %v725 = vxor.u32 %v572, 2147483648
      %v726 = vxor.u32 %v574, 2147483648
      %v727 = vxor.u32 %v577, 2147483648
      %v728 = vxor.u32 %v579, 2147483648
      %v729 = vxor.u32 %v582, 2147483648
      %v730 = vxor.u32 %v584, 2147483648
      %v731 = vxor.u32 %v587, 2147483648
      %v732 = vxor.u32 %v589, 2147483648
      %v733 = vxor.u32 %v592, 2147483648
      %v734 = vxor.u32 %v594, 2147483648
      %v735 = vxor.u32 %v597, 2147483648
      %v736 = vxor.u32 %v599, 2147483648
      %v737 = vxor.u32 %v602, 2147483648
      %v738 = vxor.u32 %v604, 2147483648
      %v739 = vxor.u32 %v607, 2147483648
      %v740 = vxor.u32 %v609, 2147483648
      %v741 = vxor.u32 %v612, 2147483648
      %v742 = vxor.u32 %v614, 2147483648
      %v743 = vxor.u32 %v617, 2147483648
      %v744 = vxor.u32 %v619, 2147483648
      %v745 = vxor.u32 %v622, 2147483648
      %v746 = vxor.u32 %v624, 2147483648
      %v747 = vxor.u32 %v627, 2147483648
      %v748 = vxor.u32 %v629, 2147483648
      %v749 = vxor.u32 %v632, 2147483648
      %v750 = vxor.u32 %v634, 2147483648
      %v751 = vxor.u32 %v637, 2147483648
      %v752 = vxor.u32 %v639, 2147483648
      %v753 = vxor.u32 %v642, 2147483648
      %v754 = vxor.u32 %v644, 2147483648
      %v755 = vxor.u32 %v647, 2147483648
      %v756 = vxor.u32 %v649, 2147483648
      %v757 = vxor.u32 %v652, 2147483648
      %v758 = vxor.u32 %v654, 2147483648
      %v759 = vxor.u32 %v657, 2147483648
      %v760 = vxor.u32 %v659, 2147483648
      %v761 = vxor.u32 %v662, 2147483648
      %v762 = vxor.u32 %v664, 2147483648
      %v763 = vxor.u32 %v667, 2147483648
      %v764 = vxor.u32 %v669, 2147483648
      %v765 = vxor.u32 %v672, 2147483648
      %v766 = vxor.u32 %v674, 2147483648
      %v767 = vxor.u32 %v677, 2147483648
      %v768 = vxor.u32 %v679, 2147483648
      %v769 = vxor.u32 %v682, 2147483648
      %v770 = vxor.u32 %v684, 2147483648
      %v771 = vxor.u32 %v687, 2147483648
      %v772 = vxor.u32 %v689, 2147483648
      %v773 = vxor.u32 %v692, 2147483648
      %v774 = vxor.u32 %v694, 2147483648
      %v775 = vxor.u32 %v697, 2147483648
      %v776 = vxor.u32 %v699, 2147483648
      %v777 = vxor.u32 %v702, 2147483648
      %v778 = vxor.u32 %v704, 2147483648
      %v779 = vxor.u32 %v707, 2147483648
      %v780 = vxor.u32 %v709, 2147483648
      %v781 = vxor.u32 %v712, 2147483648
      %v782 = vxor.u32 %v714, 2147483648
      %v783 = vxor.u32 %v717, 2147483648
      %v784 = vxor.u32 %v719, 2147483648
      %v785 = vmul.f32 %v721, 1.442695
      %v786 = vpow.pop %v785
      %v787 = vmul.f32 %v722, 1.442695
      %v788 = vpow.pop %v787
      %v789 = vmul.f32 %v723, 1.442695
      %v790 = vpow.pop %v789
      %v791 = vmul.f32 %v724, 1.442695
      %v792 = vpow.pop %v791
      %v793 = vmul.f32 %v725, 1.442695
      %v794 = vpow.pop %v793
      %v795 = vmul.f32 %v726, 1.442695
      %v796 = vpow.pop %v795
      %v797 = vmul.f32 %v727, 1.442695
      %v798 = vpow.pop %v797
      %v799 = vmul.f32 %v728, 1.442695
      %v800 = vpow.pop %v799
      %v801 = vmul.f32 %v729, 1.442695
      %v802 = vpow.pop %v801
      %v803 = vmul.f32 %v730, 1.442695
      %v804 = vpow.pop %v803
      %v805 = vmul.f32 %v731, 1.442695
      %v806 = vpow.pop %v805
      %v807 = vmul.f32 %v732, 1.442695
      %v808 = vpow.pop %v807
      %v809 = vmul.f32 %v733, 1.442695
      %v810 = vpow.pop %v809
      %v811 = vmul.f32 %v734, 1.442695
      %v812 = vpow.pop %v811
      %v813 = vmul.f32 %v735, 1.442695
      %v814 = vpow.pop %v813
      %v815 = vmul.f32 %v736, 1.442695
      %v816 = vpow.pop %v815
      %v817 = vmul.f32 %v737, 1.442695
      %v818 = vpow.pop %v817
      %v819 = vmul.f32 %v738, 1.442695
      %v820 = vpow.pop %v819
      %v821 = vmul.f32 %v739, 1.442695
      %v822 = vpow.pop %v821
      %v823 = vmul.f32 %v740, 1.442695
      %v824 = vpow.pop %v823
      %v825 = vmul.f32 %v741, 1.442695
      %v826 = vpow.pop %v825
      %v827 = vmul.f32 %v742, 1.442695
      %v828 = vpow.pop %v827
      %v829 = vmul.f32 %v743, 1.442695
      %v830 = vpow.pop %v829
      %v831 = vmul.f32 %v744, 1.442695
      %v832 = vpow.pop %v831
      %v833 = vmul.f32 %v745, 1.442695
      %v834 = vpow.pop %v833
      %v835 = vmul.f32 %v746, 1.442695
      %v836 = vpow.pop %v835
      %v837 = vmul.f32 %v747, 1.442695
      %v838 = vpow.pop %v837
      %v839 = vmul.f32 %v748, 1.442695
      %v840 = vpow.pop %v839
      %v841 = vmul.f32 %v749, 1.442695
      %v842 = vpow.pop %v841
      %v843 = vmul.f32 %v750, 1.442695
      %v844 = vpow.pop %v843
      %v845 = vmul.f32 %v751, 1.442695
      %v846 = vpow.pop %v845
      %v847 = vmul.f32 %v752, 1.442695
      %v848 = vpow.pop %v847
      %v849 = vmul.f32 %v753, 1.442695
      %v850 = vpow.pop %v849
      %v851 = vmul.f32 %v754, 1.442695
      %v852 = vpow.pop %v851
      %v853 = vmul.f32 %v755, 1.442695
      %v854 = vpow.pop %v853
      %v855 = vmul.f32 %v756, 1.442695
      %v856 = vpow.pop %v855
      %v857 = vmul.f32 %v757, 1.442695
      %v858 = vpow.pop %v857
      %v859 = vmul.f32 %v758, 1.442695
      %v860 = vpow.pop %v859
      %v861 = vmul.f32 %v759, 1.442695
      %v862 = vpow.pop %v861
      %v863 = vmul.f32 %v760, 1.442695
      %v864 = vpow.pop %v863
      %v865 = vmul.f32 %v761, 1.442695
      %v866 = vpow.pop %v865
      %v867 = vmul.f32 %v762, 1.442695
      %v868 = vpow.pop %v867
      %v869 = vmul.f32 %v763, 1.442695
      %v870 = vpow.pop %v869
      %v871 = vmul.f32 %v764, 1.442695
      %v872 = vpow.pop %v871
      %v873 = vmul.f32 %v765, 1.442695
      %v874 = vpow.pop %v873
      %v875 = vmul.f32 %v766, 1.442695
      %v876 = vpow.pop %v875
      %v877 = vmul.f32 %v767, 1.442695
      %v878 = vpow.pop %v877
      %v879 = vmul.f32 %v768, 1.442695
      %v880 = vpow.pop %v879
      %v881 = vmul.f32 %v769, 1.442695
      %v882 = vpow.pop %v881
      %v883 = vmul.f32 %v770, 1.442695
      %v884 = vpow.pop %v883
      %v885 = vmul.f32 %v771, 1.442695
      %v886 = vpow.pop %v885
      %v887 = vmul.f32 %v772, 1.442695
      %v888 = vpow.pop %v887
      %v889 = vmul.f32 %v773, 1.442695
      %v890 = vpow.pop %v889
      %v891 = vmul.f32 %v774, 1.442695
      %v892 = vpow.pop %v891
      %v893 = vmul.f32 %v775, 1.442695
      %v894 = vpow.pop %v893
      %v895 = vmul.f32 %v776, 1.442695
      %v896 = vpow.pop %v895
      %v897 = vmul.f32 %v777, 1.442695
      %v898 = vpow.pop %v897
      %v899 = vmul.f32 %v778, 1.442695
      %v900 = vpow.pop %v899
      %v901 = vmul.f32 %v779, 1.442695
      %v902 = vpow.pop %v901
      %v903 = vmul.f32 %v780, 1.442695
      %v904 = vpow.pop %v903
      %v905 = vmul.f32 %v781, 1.442695
      %v906 = vpow.pop %v905
      %v907 = vmul.f32 %v782, 1.442695
      %v908 = vpow.pop %v907
      %v909 = vmul.f32 %v783, 1.442695
      %v910 = vpow.pop %v909
      %v911 = vmul.f32 %v784, 1.442695
      %v912 = vpow.pop %v911
      %v913 = vadd.f32 %v786, 1.0
      %v914 = vadd.f32 %v788, 1.0
      %v915 = vadd.f32 %v790, 1.0
      %v916 = vadd.f32 %v792, 1.0
      %v917 = vadd.f32 %v794, 1.0
      %v918 = vadd.f32 %v796, 1.0
      %v919 = vadd.f32 %v798, 1.0
      %v920 = vadd.f32 %v800, 1.0
      %v921 = vadd.f32 %v802, 1.0
      %v922 = vadd.f32 %v804, 1.0
      %v923 = vadd.f32 %v806, 1.0
      %v924 = vadd.f32 %v808, 1.0
      %v925 = vadd.f32 %v810, 1.0
      %v926 = vadd.f32 %v812, 1.0
      %v927 = vadd.f32 %v814, 1.0
      %v928 = vadd.f32 %v816, 1.0
      %v929 = vadd.f32 %v818, 1.0
      %v930 = vadd.f32 %v820, 1.0
      %v931 = vadd.f32 %v822, 1.0
      %v932 = vadd.f32 %v824, 1.0
      %v933 = vadd.f32 %v826, 1.0
      %v934 = vadd.f32 %v828, 1.0
      %v935 = vadd.f32 %v830, 1.0
      %v936 = vadd.f32 %v832, 1.0
      %v937 = vadd.f32 %v834, 1.0
      %v938 = vadd.f32 %v836, 1.0
      %v939 = vadd.f32 %v838, 1.0
      %v940 = vadd.f32 %v840, 1.0
      %v941 = vadd.f32 %v842, 1.0
      %v942 = vadd.f32 %v844, 1.0
      %v943 = vadd.f32 %v846, 1.0
      %v944 = vadd.f32 %v848, 1.0
      %v945 = vadd.f32 %v850, 1.0
      %v946 = vadd.f32 %v852, 1.0
      %v947 = vadd.f32 %v854, 1.0
      %v948 = vadd.f32 %v856, 1.0
      %v949 = vadd.f32 %v858, 1.0
      %v950 = vadd.f32 %v860, 1.0
      %v951 = vadd.f32 %v862, 1.0
      %v952 = vadd.f32 %v864, 1.0
      %v953 = vadd.f32 %v866, 1.0
      %v954 = vadd.f32 %v868, 1.0
      %v955 = vadd.f32 %v870, 1.0
      %v956 = vadd.f32 %v872, 1.0
      %v957 = vadd.f32 %v874, 1.0
      %v958 = vadd.f32 %v876, 1.0
      %v959 = vadd.f32 %v878, 1.0
      %v960 = vadd.f32 %v880, 1.0
      %v961 = vadd.f32 %v882, 1.0
      %v962 = vadd.f32 %v884, 1.0
      %v963 = vadd.f32 %v886, 1.0
      %v964 = vadd.f32 %v888, 1.0
      %v965 = vadd.f32 %v890, 1.0
      %v966 = vadd.f32 %v892, 1.0
      %v967 = vadd.f32 %v894, 1.0
      %v968 = vadd.f32 %v896, 1.0
      %v969 = vadd.f32 %v898, 1.0
      %v970 = vadd.f32 %v900, 1.0
      %v971 = vadd.f32 %v902, 1.0
      %v972 = vadd.f32 %v904, 1.0
      %v973 = vadd.f32 %v906, 1.0
      %v974 = vadd.f32 %v908, 1.0
      %v975 = vadd.f32 %v910, 1.0
      %v976 = vadd.f32 %v912, 1.0
      %v977 = vrcp.pop %v913
      %v978 = vmul.f32 %v913, %v977
      %v979 = vsub.f32 1.0, %v978
      %v980 = vmul.f32 %v977, %v979
      %v981 = vadd.f32 %v977, %v980
      %vm982 = vweird.f32 %v913
      %vm983 = vweird.f32 %v977
      %vm984 = vmor %vm982, %vm983
      %v985 = vsel %vm984, %v977, %v981
      %v986 = vand.u32 2147483647, %v913
      %vm987 = vcmp.eq.f32.partialorder %v986, 8.507059e+37
      %v988 = vand.u32 %v913, 2147483648
      %v989 = vor.u32 1.1754944e-38, %v988
      %v990 = vsel %vm987, %v989, %v985
      %v991 = vmul.f32 1.0, %v990
      %v992 = vrcp.pop %v914
      %v993 = vmul.f32 %v914, %v992
      %v994 = vsub.f32 1.0, %v993
      %v995 = vmul.f32 %v992, %v994
      %v996 = vadd.f32 %v992, %v995
      %vm997 = vweird.f32 %v914
      %vm998 = vweird.f32 %v992
      %vm999 = vmor %vm997, %vm998
      %v1000 = vsel %vm999, %v992, %v996
      %v1001 = vand.u32 2147483647, %v914
      %vm1002 = vcmp.eq.f32.partialorder %v1001, 8.507059e+37
      %v1003 = vand.u32 %v914, 2147483648
      %v1004 = vor.u32 1.1754944e-38, %v1003
      %v1005 = vsel %vm1002, %v1004, %v1000
      %v1006 = vmul.f32 1.0, %v1005
      %v1007 = vrcp.pop %v915
      %v1008 = vmul.f32 %v915, %v1007
      %v1009 = vsub.f32 1.0, %v1008
      %v1010 = vmul.f32 %v1007, %v1009
      %v1011 = vadd.f32 %v1007, %v1010
      %vm1012 = vweird.f32 %v915
      %vm1013 = vweird.f32 %v1007
      %vm1014 = vmor %vm1012, %vm1013
      %v1015 = vsel %vm1014, %v1007, %v1011
      %v1016 = vand.u32 2147483647, %v915
      %vm1017 = vcmp.eq.f32.partialorder %v1016, 8.507059e+37
      %v1018 = vand.u32 %v915, 2147483648
      %v1019 = vor.u32 1.1754944e-38, %v1018
      %v1020 = vsel %vm1017, %v1019, %v1015
      %v1021 = vmul.f32 1.0, %v1020
      %v1022 = vrcp.pop %v916
      %v1023 = vmul.f32 %v916, %v1022
      %v1024 = vsub.f32 1.0, %v1023
      %v1025 = vmul.f32 %v1022, %v1024
      %v1026 = vadd.f32 %v1022, %v1025
      %vm1027 = vweird.f32 %v916
      %vm1028 = vweird.f32 %v1022
      %vm1029 = vmor %vm1027, %vm1028
      %v1030 = vsel %vm1029, %v1022, %v1026
      %v1031 = vand.u32 2147483647, %v916
      %vm1032 = vcmp.eq.f32.partialorder %v1031, 8.507059e+37
      %v1033 = vand.u32 %v916, 2147483648
      %v1034 = vor.u32 1.1754944e-38, %v1033
      %v1035 = vsel %vm1032, %v1034, %v1030
      %v1036 = vmul.f32 1.0, %v1035
      %v1037 = vrcp.pop %v917
      %v1038 = vmul.f32 %v917, %v1037
      %v1039 = vsub.f32 1.0, %v1038
      %v1040 = vmul.f32 %v1037, %v1039
      %v1041 = vadd.f32 %v1037, %v1040
      %vm1042 = vweird.f32 %v917
      %vm1043 = vweird.f32 %v1037
      %vm1044 = vmor %vm1042, %vm1043
      %v1045 = vsel %vm1044, %v1037, %v1041
      %v1046 = vand.u32 2147483647, %v917
      %vm1047 = vcmp.eq.f32.partialorder %v1046, 8.507059e+37
      %v1048 = vand.u32 %v917, 2147483648
      %v1049 = vor.u32 1.1754944e-38, %v1048
      %v1050 = vsel %vm1047, %v1049, %v1045
      %v1051 = vmul.f32 1.0, %v1050
      %v1052 = vrcp.pop %v918
      %v1053 = vmul.f32 %v918, %v1052
      %v1054 = vsub.f32 1.0, %v1053
      %v1055 = vmul.f32 %v1052, %v1054
      %v1056 = vadd.f32 %v1052, %v1055
      %vm1057 = vweird.f32 %v918
      %vm1058 = vweird.f32 %v1052
      %vm1059 = vmor %vm1057, %vm1058
      %v1060 = vsel %vm1059, %v1052, %v1056
      %v1061 = vand.u32 2147483647, %v918
      %vm1062 = vcmp.eq.f32.partialorder %v1061, 8.507059e+37
      %v1063 = vand.u32 %v918, 2147483648
      %v1064 = vor.u32 1.1754944e-38, %v1063
      %v1065 = vsel %vm1062, %v1064, %v1060
      %v1066 = vmul.f32 1.0, %v1065
      %v1067 = vrcp.pop %v919
      %v1068 = vmul.f32 %v919, %v1067
      %v1069 = vsub.f32 1.0, %v1068
      %v1070 = vmul.f32 %v1067, %v1069
      %v1071 = vadd.f32 %v1067, %v1070
      %vm1072 = vweird.f32 %v919
      %vm1073 = vweird.f32 %v1067
      %vm1074 = vmor %vm1072, %vm1073
      %v1075 = vsel %vm1074, %v1067, %v1071
      %v1076 = vand.u32 2147483647, %v919
      %vm1077 = vcmp.eq.f32.partialorder %v1076, 8.507059e+37
      %v1078 = vand.u32 %v919, 2147483648
      %v1079 = vor.u32 1.1754944e-38, %v1078
      %v1080 = vsel %vm1077, %v1079, %v1075
      %v1081 = vmul.f32 1.0, %v1080
      %v1082 = vrcp.pop %v920
      %v1083 = vmul.f32 %v920, %v1082
      %v1084 = vsub.f32 1.0, %v1083
      %v1085 = vmul.f32 %v1082, %v1084
      %v1086 = vadd.f32 %v1082, %v1085
      %vm1087 = vweird.f32 %v920
      %vm1088 = vweird.f32 %v1082
      %vm1089 = vmor %vm1087, %vm1088
      %v1090 = vsel %vm1089, %v1082, %v1086
      %v1091 = vand.u32 2147483647, %v920
      %vm1092 = vcmp.eq.f32.partialorder %v1091, 8.507059e+37
      %v1093 = vand.u32 %v920, 2147483648
      %v1094 = vor.u32 1.1754944e-38, %v1093
      %v1095 = vsel %vm1092, %v1094, %v1090
      %v1096 = vmul.f32 1.0, %v1095
      %v1097 = vrcp.pop %v921
      %v1098 = vmul.f32 %v921, %v1097
      %v1099 = vsub.f32 1.0, %v1098
      %v1100 = vmul.f32 %v1097, %v1099
      %v1101 = vadd.f32 %v1097, %v1100
      %vm1102 = vweird.f32 %v921
      %vm1103 = vweird.f32 %v1097
      %vm1104 = vmor %vm1102, %vm1103
      %v1105 = vsel %vm1104, %v1097, %v1101
      %v1106 = vand.u32 2147483647, %v921
      %vm1107 = vcmp.eq.f32.partialorder %v1106, 8.507059e+37
      %v1108 = vand.u32 %v921, 2147483648
      %v1109 = vor.u32 1.1754944e-38, %v1108
      %v1110 = vsel %vm1107, %v1109, %v1105
      %v1111 = vmul.f32 1.0, %v1110
      %v1112 = vrcp.pop %v922
      %v1113 = vmul.f32 %v922, %v1112
      %v1114 = vsub.f32 1.0, %v1113
      %v1115 = vmul.f32 %v1112, %v1114
      %v1116 = vadd.f32 %v1112, %v1115
      %vm1117 = vweird.f32 %v922
      %vm1118 = vweird.f32 %v1112
      %vm1119 = vmor %vm1117, %vm1118
      %v1120 = vsel %vm1119, %v1112, %v1116
      %v1121 = vand.u32 2147483647, %v922
      %vm1122 = vcmp.eq.f32.partialorder %v1121, 8.507059e+37
      %v1123 = vand.u32 %v922, 2147483648
      %v1124 = vor.u32 1.1754944e-38, %v1123
      %v1125 = vsel %vm1122, %v1124, %v1120
      %v1126 = vmul.f32 1.0, %v1125
      %v1127 = vrcp.pop %v923
      %v1128 = vmul.f32 %v923, %v1127
      %v1129 = vsub.f32 1.0, %v1128
      %v1130 = vmul.f32 %v1127, %v1129
      %v1131 = vadd.f32 %v1127, %v1130
      %vm1132 = vweird.f32 %v923
      %vm1133 = vweird.f32 %v1127
      %vm1134 = vmor %vm1132, %vm1133
      %v1135 = vsel %vm1134, %v1127, %v1131
      %v1136 = vand.u32 2147483647, %v923
      %vm1137 = vcmp.eq.f32.partialorder %v1136, 8.507059e+37
      %v1138 = vand.u32 %v923, 2147483648
      %v1139 = vor.u32 1.1754944e-38, %v1138
      %v1140 = vsel %vm1137, %v1139, %v1135
      %v1141 = vmul.f32 1.0, %v1140
      %v1142 = vrcp.pop %v924
      %v1143 = vmul.f32 %v924, %v1142
      %v1144 = vsub.f32 1.0, %v1143
      %v1145 = vmul.f32 %v1142, %v1144
      %v1146 = vadd.f32 %v1142, %v1145
      %vm1147 = vweird.f32 %v924
      %vm1148 = vweird.f32 %v1142
      %vm1149 = vmor %vm1147, %vm1148
      %v1150 = vsel %vm1149, %v1142, %v1146
      %v1151 = vand.u32 2147483647, %v924
      %vm1152 = vcmp.eq.f32.partialorder %v1151, 8.507059e+37
      %v1153 = vand.u32 %v924, 2147483648
      %v1154 = vor.u32 1.1754944e-38, %v1153
      %v1155 = vsel %vm1152, %v1154, %v1150
      %v1156 = vmul.f32 1.0, %v1155
      %v1157 = vrcp.pop %v925
      %v1158 = vmul.f32 %v925, %v1157
      %v1159 = vsub.f32 1.0, %v1158
      %v1160 = vmul.f32 %v1157, %v1159
      %v1161 = vadd.f32 %v1157, %v1160
      %vm1162 = vweird.f32 %v925
      %vm1163 = vweird.f32 %v1157
      %vm1164 = vmor %vm1162, %vm1163
      %v1165 = vsel %vm1164, %v1157, %v1161
      %v1166 = vand.u32 2147483647, %v925
      %vm1167 = vcmp.eq.f32.partialorder %v1166, 8.507059e+37
      %v1168 = vand.u32 %v925, 2147483648
      %v1169 = vor.u32 1.1754944e-38, %v1168
      %v1170 = vsel %vm1167, %v1169, %v1165
      %v1171 = vmul.f32 1.0, %v1170
      %v1172 = vrcp.pop %v926
      %v1173 = vmul.f32 %v926, %v1172
      %v1174 = vsub.f32 1.0, %v1173
      %v1175 = vmul.f32 %v1172, %v1174
      %v1176 = vadd.f32 %v1172, %v1175
      %vm1177 = vweird.f32 %v926
      %vm1178 = vweird.f32 %v1172
      %vm1179 = vmor %vm1177, %vm1178
      %v1180 = vsel %vm1179, %v1172, %v1176
      %v1181 = vand.u32 2147483647, %v926
      %vm1182 = vcmp.eq.f32.partialorder %v1181, 8.507059e+37
      %v1183 = vand.u32 %v926, 2147483648
      %v1184 = vor.u32 1.1754944e-38, %v1183
      %v1185 = vsel %vm1182, %v1184, %v1180
      %v1186 = vmul.f32 1.0, %v1185
      %v1187 = vrcp.pop %v927
      %v1188 = vmul.f32 %v927, %v1187
      %v1189 = vsub.f32 1.0, %v1188
      %v1190 = vmul.f32 %v1187, %v1189
      %v1191 = vadd.f32 %v1187, %v1190
      %vm1192 = vweird.f32 %v927
      %vm1193 = vweird.f32 %v1187
      %vm1194 = vmor %vm1192, %vm1193
      %v1195 = vsel %vm1194, %v1187, %v1191
      %v1196 = vand.u32 2147483647, %v927
      %vm1197 = vcmp.eq.f32.partialorder %v1196, 8.507059e+37
      %v1198 = vand.u32 %v927, 2147483648
      %v1199 = vor.u32 1.1754944e-38, %v1198
      %v1200 = vsel %vm1197, %v1199, %v1195
      %v1201 = vmul.f32 1.0, %v1200
      %v1202 = vrcp.pop %v928
      %v1203 = vmul.f32 %v928, %v1202
      %v1204 = vsub.f32 1.0, %v1203
      %v1205 = vmul.f32 %v1202, %v1204
      %v1206 = vadd.f32 %v1202, %v1205
      %vm1207 = vweird.f32 %v928
      %vm1208 = vweird.f32 %v1202
      %vm1209 = vmor %vm1207, %vm1208
      %v1210 = vsel %vm1209, %v1202, %v1206
      %v1211 = vand.u32 2147483647, %v928
      %vm1212 = vcmp.eq.f32.partialorder %v1211, 8.507059e+37
      %v1213 = vand.u32 %v928, 2147483648
      %v1214 = vor.u32 1.1754944e-38, %v1213
      %v1215 = vsel %vm1212, %v1214, %v1210
      %v1216 = vmul.f32 1.0, %v1215
      %v1217 = vrcp.pop %v929
      %v1218 = vmul.f32 %v929, %v1217
      %v1219 = vsub.f32 1.0, %v1218
      %v1220 = vmul.f32 %v1217, %v1219
      %v1221 = vadd.f32 %v1217, %v1220
      %vm1222 = vweird.f32 %v929
      %vm1223 = vweird.f32 %v1217
      %vm1224 = vmor %vm1222, %vm1223
      %v1225 = vsel %vm1224, %v1217, %v1221
      %v1226 = vand.u32 2147483647, %v929
      %vm1227 = vcmp.eq.f32.partialorder %v1226, 8.507059e+37
      %v1228 = vand.u32 %v929, 2147483648
      %v1229 = vor.u32 1.1754944e-38, %v1228
      %v1230 = vsel %vm1227, %v1229, %v1225
      %v1231 = vmul.f32 1.0, %v1230
      %v1232 = vrcp.pop %v930
      %v1233 = vmul.f32 %v930, %v1232
      %v1234 = vsub.f32 1.0, %v1233
      %v1235 = vmul.f32 %v1232, %v1234
      %v1236 = vadd.f32 %v1232, %v1235
      %vm1237 = vweird.f32 %v930
      %vm1238 = vweird.f32 %v1232
      %vm1239 = vmor %vm1237, %vm1238
      %v1240 = vsel %vm1239, %v1232, %v1236
      %v1241 = vand.u32 2147483647, %v930
      %vm1242 = vcmp.eq.f32.partialorder %v1241, 8.507059e+37
      %v1243 = vand.u32 %v930, 2147483648
      %v1244 = vor.u32 1.1754944e-38, %v1243
      %v1245 = vsel %vm1242, %v1244, %v1240
      %v1246 = vmul.f32 1.0, %v1245
      %v1247 = vrcp.pop %v931
      %v1248 = vmul.f32 %v931, %v1247
      %v1249 = vsub.f32 1.0, %v1248
      %v1250 = vmul.f32 %v1247, %v1249
      %v1251 = vadd.f32 %v1247, %v1250
      %vm1252 = vweird.f32 %v931
      %vm1253 = vweird.f32 %v1247
      %vm1254 = vmor %vm1252, %vm1253
      %v1255 = vsel %vm1254, %v1247, %v1251
      %v1256 = vand.u32 2147483647, %v931
      %vm1257 = vcmp.eq.f32.partialorder %v1256, 8.507059e+37
      %v1258 = vand.u32 %v931, 2147483648
      %v1259 = vor.u32 1.1754944e-38, %v1258
      %v1260 = vsel %vm1257, %v1259, %v1255
      %v1261 = vmul.f32 1.0, %v1260
      %v1262 = vrcp.pop %v932
      %v1263 = vmul.f32 %v932, %v1262
      %v1264 = vsub.f32 1.0, %v1263
      %v1265 = vmul.f32 %v1262, %v1264
      %v1266 = vadd.f32 %v1262, %v1265
      %vm1267 = vweird.f32 %v932
      %vm1268 = vweird.f32 %v1262
      %vm1269 = vmor %vm1267, %vm1268
      %v1270 = vsel %vm1269, %v1262, %v1266
      %v1271 = vand.u32 2147483647, %v932
      %vm1272 = vcmp.eq.f32.partialorder %v1271, 8.507059e+37
      %v1273 = vand.u32 %v932, 2147483648
      %v1274 = vor.u32 1.1754944e-38, %v1273
      %v1275 = vsel %vm1272, %v1274, %v1270
      %v1276 = vmul.f32 1.0, %v1275
      %v1277 = vrcp.pop %v933
      %v1278 = vmul.f32 %v933, %v1277
      %v1279 = vsub.f32 1.0, %v1278
      %v1280 = vmul.f32 %v1277, %v1279
      %v1281 = vadd.f32 %v1277, %v1280
      %vm1282 = vweird.f32 %v933
      %vm1283 = vweird.f32 %v1277
      %vm1284 = vmor %vm1282, %vm1283
      %v1285 = vsel %vm1284, %v1277, %v1281
      %v1286 = vand.u32 2147483647, %v933
      %vm1287 = vcmp.eq.f32.partialorder %v1286, 8.507059e+37
      %v1288 = vand.u32 %v933, 2147483648
      %v1289 = vor.u32 1.1754944e-38, %v1288
      %v1290 = vsel %vm1287, %v1289, %v1285
      %v1291 = vmul.f32 1.0, %v1290
      %v1292 = vrcp.pop %v934
      %v1293 = vmul.f32 %v934, %v1292
      %v1294 = vsub.f32 1.0, %v1293
      %v1295 = vmul.f32 %v1292, %v1294
      %v1296 = vadd.f32 %v1292, %v1295
      %vm1297 = vweird.f32 %v934
      %vm1298 = vweird.f32 %v1292
      %vm1299 = vmor %vm1297, %vm1298
      %v1300 = vsel %vm1299, %v1292, %v1296
      %v1301 = vand.u32 2147483647, %v934
      %vm1302 = vcmp.eq.f32.partialorder %v1301, 8.507059e+37
      %v1303 = vand.u32 %v934, 2147483648
      %v1304 = vor.u32 1.1754944e-38, %v1303
      %v1305 = vsel %vm1302, %v1304, %v1300
      %v1306 = vmul.f32 1.0, %v1305
      %v1307 = vrcp.pop %v935
      %v1308 = vmul.f32 %v935, %v1307
      %v1309 = vsub.f32 1.0, %v1308
      %v1310 = vmul.f32 %v1307, %v1309
      %v1311 = vadd.f32 %v1307, %v1310
      %vm1312 = vweird.f32 %v935
      %vm1313 = vweird.f32 %v1307
      %vm1314 = vmor %vm1312, %vm1313
      %v1315 = vsel %vm1314, %v1307, %v1311
      %v1316 = vand.u32 2147483647, %v935
      %vm1317 = vcmp.eq.f32.partialorder %v1316, 8.507059e+37
      %v1318 = vand.u32 %v935, 2147483648
      %v1319 = vor.u32 1.1754944e-38, %v1318
      %v1320 = vsel %vm1317, %v1319, %v1315
      %v1321 = vmul.f32 1.0, %v1320
      %v1322 = vrcp.pop %v936
      %v1323 = vmul.f32 %v936, %v1322
      %v1324 = vsub.f32 1.0, %v1323
      %v1325 = vmul.f32 %v1322, %v1324
      %v1326 = vadd.f32 %v1322, %v1325
      %vm1327 = vweird.f32 %v936
      %vm1328 = vweird.f32 %v1322
      %vm1329 = vmor %vm1327, %vm1328
      %v1330 = vsel %vm1329, %v1322, %v1326
      %v1331 = vand.u32 2147483647, %v936
      %vm1332 = vcmp.eq.f32.partialorder %v1331, 8.507059e+37
      %v1333 = vand.u32 %v936, 2147483648
      %v1334 = vor.u32 1.1754944e-38, %v1333
      %v1335 = vsel %vm1332, %v1334, %v1330
      %v1336 = vmul.f32 1.0, %v1335
      %v1337 = vrcp.pop %v937
      %v1338 = vmul.f32 %v937, %v1337
      %v1339 = vsub.f32 1.0, %v1338
      %v1340 = vmul.f32 %v1337, %v1339
      %v1341 = vadd.f32 %v1337, %v1340
      %vm1342 = vweird.f32 %v937
      %vm1343 = vweird.f32 %v1337
      %vm1344 = vmor %vm1342, %vm1343
      %v1345 = vsel %vm1344, %v1337, %v1341
      %v1346 = vand.u32 2147483647, %v937
      %vm1347 = vcmp.eq.f32.partialorder %v1346, 8.507059e+37
      %v1348 = vand.u32 %v937, 2147483648
      %v1349 = vor.u32 1.1754944e-38, %v1348
      %v1350 = vsel %vm1347, %v1349, %v1345
      %v1351 = vmul.f32 1.0, %v1350
      %v1352 = vrcp.pop %v938
      %v1353 = vmul.f32 %v938, %v1352
      %v1354 = vsub.f32 1.0, %v1353
      %v1355 = vmul.f32 %v1352, %v1354
      %v1356 = vadd.f32 %v1352, %v1355
      %vm1357 = vweird.f32 %v938
      %vm1358 = vweird.f32 %v1352
      %vm1359 = vmor %vm1357, %vm1358
      %v1360 = vsel %vm1359, %v1352, %v1356
      %v1361 = vand.u32 2147483647, %v938
      %vm1362 = vcmp.eq.f32.partialorder %v1361, 8.507059e+37
      %v1363 = vand.u32 %v938, 2147483648
      %v1364 = vor.u32 1.1754944e-38, %v1363
      %v1365 = vsel %vm1362, %v1364, %v1360
      %v1366 = vmul.f32 1.0, %v1365
      %v1367 = vrcp.pop %v939
      %v1368 = vmul.f32 %v939, %v1367
      %v1369 = vsub.f32 1.0, %v1368
      %v1370 = vmul.f32 %v1367, %v1369
      %v1371 = vadd.f32 %v1367, %v1370
      %vm1372 = vweird.f32 %v939
      %vm1373 = vweird.f32 %v1367
      %vm1374 = vmor %vm1372, %vm1373
      %v1375 = vsel %vm1374, %v1367, %v1371
      %v1376 = vand.u32 2147483647, %v939
      %vm1377 = vcmp.eq.f32.partialorder %v1376, 8.507059e+37
      %v1378 = vand.u32 %v939, 2147483648
      %v1379 = vor.u32 1.1754944e-38, %v1378
      %v1380 = vsel %vm1377, %v1379, %v1375
      %v1381 = vmul.f32 1.0, %v1380
      %v1382 = vrcp.pop %v940
      %v1383 = vmul.f32 %v940, %v1382
      %v1384 = vsub.f32 1.0, %v1383
      %v1385 = vmul.f32 %v1382, %v1384
      %v1386 = vadd.f32 %v1382, %v1385
      %vm1387 = vweird.f32 %v940
      %vm1388 = vweird.f32 %v1382
      %vm1389 = vmor %vm1387, %vm1388
      %v1390 = vsel %vm1389, %v1382, %v1386
      %v1391 = vand.u32 2147483647, %v940
      %vm1392 = vcmp.eq.f32.partialorder %v1391, 8.507059e+37
      %v1393 = vand.u32 %v940, 2147483648
      %v1394 = vor.u32 1.1754944e-38, %v1393
      %v1395 = vsel %vm1392, %v1394, %v1390
      %v1396 = vmul.f32 1.0, %v1395
      %v1397 = vrcp.pop %v941
      %v1398 = vmul.f32 %v941, %v1397
      %v1399 = vsub.f32 1.0, %v1398
      %v1400 = vmul.f32 %v1397, %v1399
      %v1401 = vadd.f32 %v1397, %v1400
      %vm1402 = vweird.f32 %v941
      %vm1403 = vweird.f32 %v1397
      %vm1404 = vmor %vm1402, %vm1403
      %v1405 = vsel %vm1404, %v1397, %v1401
      %v1406 = vand.u32 2147483647, %v941
      %vm1407 = vcmp.eq.f32.partialorder %v1406, 8.507059e+37
      %v1408 = vand.u32 %v941, 2147483648
      %v1409 = vor.u32 1.1754944e-38, %v1408
      %v1410 = vsel %vm1407, %v1409, %v1405
      %v1411 = vmul.f32 1.0, %v1410
      %v1412 = vrcp.pop %v942
      %v1413 = vmul.f32 %v942, %v1412
      %v1414 = vsub.f32 1.0, %v1413
      %v1415 = vmul.f32 %v1412, %v1414
      %v1416 = vadd.f32 %v1412, %v1415
      %vm1417 = vweird.f32 %v942
      %vm1418 = vweird.f32 %v1412
      %vm1419 = vmor %vm1417, %vm1418
      %v1420 = vsel %vm1419, %v1412, %v1416
      %v1421 = vand.u32 2147483647, %v942
      %vm1422 = vcmp.eq.f32.partialorder %v1421, 8.507059e+37
      %v1423 = vand.u32 %v942, 2147483648
      %v1424 = vor.u32 1.1754944e-38, %v1423
      %v1425 = vsel %vm1422, %v1424, %v1420
      %v1426 = vmul.f32 1.0, %v1425
      %v1427 = vrcp.pop %v943
      %v1428 = vmul.f32 %v943, %v1427
      %v1429 = vsub.f32 1.0, %v1428
      %v1430 = vmul.f32 %v1427, %v1429
      %v1431 = vadd.f32 %v1427, %v1430
      %vm1432 = vweird.f32 %v943
      %vm1433 = vweird.f32 %v1427
      %vm1434 = vmor %vm1432, %vm1433
      %v1435 = vsel %vm1434, %v1427, %v1431
      %v1436 = vand.u32 2147483647, %v943
      %vm1437 = vcmp.eq.f32.partialorder %v1436, 8.507059e+37
      %v1438 = vand.u32 %v943, 2147483648
      %v1439 = vor.u32 1.1754944e-38, %v1438
      %v1440 = vsel %vm1437, %v1439, %v1435
      %v1441 = vmul.f32 1.0, %v1440
      %v1442 = vrcp.pop %v944
      %v1443 = vmul.f32 %v944, %v1442
      %v1444 = vsub.f32 1.0, %v1443
      %v1445 = vmul.f32 %v1442, %v1444
      %v1446 = vadd.f32 %v1442, %v1445
      %vm1447 = vweird.f32 %v944
      %vm1448 = vweird.f32 %v1442
      %vm1449 = vmor %vm1447, %vm1448
      %v1450 = vsel %vm1449, %v1442, %v1446
      %v1451 = vand.u32 2147483647, %v944
      %vm1452 = vcmp.eq.f32.partialorder %v1451, 8.507059e+37
      %v1453 = vand.u32 %v944, 2147483648
      %v1454 = vor.u32 1.1754944e-38, %v1453
      %v1455 = vsel %vm1452, %v1454, %v1450
      %v1456 = vmul.f32 1.0, %v1455
      %v1457 = vrcp.pop %v945
      %v1458 = vmul.f32 %v945, %v1457
      %v1459 = vsub.f32 1.0, %v1458
      %v1460 = vmul.f32 %v1457, %v1459
      %v1461 = vadd.f32 %v1457, %v1460
      %vm1462 = vweird.f32 %v945
      %vm1463 = vweird.f32 %v1457
      %vm1464 = vmor %vm1462, %vm1463
      %v1465 = vsel %vm1464, %v1457, %v1461
      %v1466 = vand.u32 2147483647, %v945
      %vm1467 = vcmp.eq.f32.partialorder %v1466, 8.507059e+37
      %v1468 = vand.u32 %v945, 2147483648
      %v1469 = vor.u32 1.1754944e-38, %v1468
      %v1470 = vsel %vm1467, %v1469, %v1465
      %v1471 = vmul.f32 1.0, %v1470
      %v1472 = vrcp.pop %v946
      %v1473 = vmul.f32 %v946, %v1472
      %v1474 = vsub.f32 1.0, %v1473
      %v1475 = vmul.f32 %v1472, %v1474
      %v1476 = vadd.f32 %v1472, %v1475
      %vm1477 = vweird.f32 %v946
      %vm1478 = vweird.f32 %v1472
      %vm1479 = vmor %vm1477, %vm1478
      %v1480 = vsel %vm1479, %v1472, %v1476
      %v1481 = vand.u32 2147483647, %v946
      %vm1482 = vcmp.eq.f32.partialorder %v1481, 8.507059e+37
      %v1483 = vand.u32 %v946, 2147483648
      %v1484 = vor.u32 1.1754944e-38, %v1483
      %v1485 = vsel %vm1482, %v1484, %v1480
      %v1486 = vmul.f32 1.0, %v1485
      %v1487 = vrcp.pop %v947
      %v1488 = vmul.f32 %v947, %v1487
      %v1489 = vsub.f32 1.0, %v1488
      %v1490 = vmul.f32 %v1487, %v1489
      %v1491 = vadd.f32 %v1487, %v1490
      %vm1492 = vweird.f32 %v947
      %vm1493 = vweird.f32 %v1487
      %vm1494 = vmor %vm1492, %vm1493
      %v1495 = vsel %vm1494, %v1487, %v1491
      %v1496 = vand.u32 2147483647, %v947
      %vm1497 = vcmp.eq.f32.partialorder %v1496, 8.507059e+37
      %v1498 = vand.u32 %v947, 2147483648
      %v1499 = vor.u32 1.1754944e-38, %v1498
      %v1500 = vsel %vm1497, %v1499, %v1495
      %v1501 = vmul.f32 1.0, %v1500
      %v1502 = vrcp.pop %v948
      %v1503 = vmul.f32 %v948, %v1502
      %v1504 = vsub.f32 1.0, %v1503
      %v1505 = vmul.f32 %v1502, %v1504
      %v1506 = vadd.f32 %v1502, %v1505
      %vm1507 = vweird.f32 %v948
      %vm1508 = vweird.f32 %v1502
      %vm1509 = vmor %vm1507, %vm1508
      %v1510 = vsel %vm1509, %v1502, %v1506
      %v1511 = vand.u32 2147483647, %v948
      %vm1512 = vcmp.eq.f32.partialorder %v1511, 8.507059e+37
      %v1513 = vand.u32 %v948, 2147483648
      %v1514 = vor.u32 1.1754944e-38, %v1513
      %v1515 = vsel %vm1512, %v1514, %v1510
      %v1516 = vmul.f32 1.0, %v1515
      %v1517 = vrcp.pop %v949
      %v1518 = vmul.f32 %v949, %v1517
      %v1519 = vsub.f32 1.0, %v1518
      %v1520 = vmul.f32 %v1517, %v1519
      %v1521 = vadd.f32 %v1517, %v1520
      %vm1522 = vweird.f32 %v949
      %vm1523 = vweird.f32 %v1517
      %vm1524 = vmor %vm1522, %vm1523
      %v1525 = vsel %vm1524, %v1517, %v1521
      %v1526 = vand.u32 2147483647, %v949
      %vm1527 = vcmp.eq.f32.partialorder %v1526, 8.507059e+37
      %v1528 = vand.u32 %v949, 2147483648
      %v1529 = vor.u32 1.1754944e-38, %v1528
      %v1530 = vsel %vm1527, %v1529, %v1525
      %v1531 = vmul.f32 1.0, %v1530
      %v1532 = vrcp.pop %v950
      %v1533 = vmul.f32 %v950, %v1532
      %v1534 = vsub.f32 1.0, %v1533
      %v1535 = vmul.f32 %v1532, %v1534
      %v1536 = vadd.f32 %v1532, %v1535
      %vm1537 = vweird.f32 %v950
      %vm1538 = vweird.f32 %v1532
      %vm1539 = vmor %vm1537, %vm1538
      %v1540 = vsel %vm1539, %v1532, %v1536
      %v1541 = vand.u32 2147483647, %v950
      %vm1542 = vcmp.eq.f32.partialorder %v1541, 8.507059e+37
      %v1543 = vand.u32 %v950, 2147483648
      %v1544 = vor.u32 1.1754944e-38, %v1543
      %v1545 = vsel %vm1542, %v1544, %v1540
      %v1546 = vmul.f32 1.0, %v1545
      %v1547 = vrcp.pop %v951
      %v1548 = vmul.f32 %v951, %v1547
      %v1549 = vsub.f32 1.0, %v1548
      %v1550 = vmul.f32 %v1547, %v1549
      %v1551 = vadd.f32 %v1547, %v1550
      %vm1552 = vweird.f32 %v951
      %vm1553 = vweird.f32 %v1547
      %vm1554 = vmor %vm1552, %vm1553
      %v1555 = vsel %vm1554, %v1547, %v1551
      %v1556 = vand.u32 2147483647, %v951
      %vm1557 = vcmp.eq.f32.partialorder %v1556, 8.507059e+37
      %v1558 = vand.u32 %v951, 2147483648
      %v1559 = vor.u32 1.1754944e-38, %v1558
      %v1560 = vsel %vm1557, %v1559, %v1555
      %v1561 = vmul.f32 1.0, %v1560
      %v1562 = vrcp.pop %v952
      %v1563 = vmul.f32 %v952, %v1562
      %v1564 = vsub.f32 1.0, %v1563
      %v1565 = vmul.f32 %v1562, %v1564
      %v1566 = vadd.f32 %v1562, %v1565
      %vm1567 = vweird.f32 %v952
      %vm1568 = vweird.f32 %v1562
      %vm1569 = vmor %vm1567, %vm1568
      %v1570 = vsel %vm1569, %v1562, %v1566
      %v1571 = vand.u32 2147483647, %v952
      %vm1572 = vcmp.eq.f32.partialorder %v1571, 8.507059e+37
      %v1573 = vand.u32 %v952, 2147483648
      %v1574 = vor.u32 1.1754944e-38, %v1573
      %v1575 = vsel %vm1572, %v1574, %v1570
      %v1576 = vmul.f32 1.0, %v1575
      %v1577 = vrcp.pop %v953
      %v1578 = vmul.f32 %v953, %v1577
      %v1579 = vsub.f32 1.0, %v1578
      %v1580 = vmul.f32 %v1577, %v1579
      %v1581 = vadd.f32 %v1577, %v1580
      %vm1582 = vweird.f32 %v953
      %vm1583 = vweird.f32 %v1577
      %vm1584 = vmor %vm1582, %vm1583
      %v1585 = vsel %vm1584, %v1577, %v1581
      %v1586 = vand.u32 2147483647, %v953
      %vm1587 = vcmp.eq.f32.partialorder %v1586, 8.507059e+37
      %v1588 = vand.u32 %v953, 2147483648
      %v1589 = vor.u32 1.1754944e-38, %v1588
      %v1590 = vsel %vm1587, %v1589, %v1585
      %v1591 = vmul.f32 1.0, %v1590
      %v1592 = vrcp.pop %v954
      %v1593 = vmul.f32 %v954, %v1592
      %v1594 = vsub.f32 1.0, %v1593
      %v1595 = vmul.f32 %v1592, %v1594
      %v1596 = vadd.f32 %v1592, %v1595
      %vm1597 = vweird.f32 %v954
      %vm1598 = vweird.f32 %v1592
      %vm1599 = vmor %vm1597, %vm1598
      %v1600 = vsel %vm1599, %v1592, %v1596
      %v1601 = vand.u32 2147483647, %v954
      %vm1602 = vcmp.eq.f32.partialorder %v1601, 8.507059e+37
      %v1603 = vand.u32 %v954, 2147483648
      %v1604 = vor.u32 1.1754944e-38, %v1603
      %v1605 = vsel %vm1602, %v1604, %v1600
      %v1606 = vmul.f32 1.0, %v1605
      %v1607 = vrcp.pop %v955
      %v1608 = vmul.f32 %v955, %v1607
      %v1609 = vsub.f32 1.0, %v1608
      %v1610 = vmul.f32 %v1607, %v1609
      %v1611 = vadd.f32 %v1607, %v1610
      %vm1612 = vweird.f32 %v955
      %vm1613 = vweird.f32 %v1607
      %vm1614 = vmor %vm1612, %vm1613
      %v1615 = vsel %vm1614, %v1607, %v1611
      %v1616 = vand.u32 2147483647, %v955
      %vm1617 = vcmp.eq.f32.partialorder %v1616, 8.507059e+37
      %v1618 = vand.u32 %v955, 2147483648
      %v1619 = vor.u32 1.1754944e-38, %v1618
      %v1620 = vsel %vm1617, %v1619, %v1615
      %v1621 = vmul.f32 1.0, %v1620
      %v1622 = vrcp.pop %v956
      %v1623 = vmul.f32 %v956, %v1622
      %v1624 = vsub.f32 1.0, %v1623
      %v1625 = vmul.f32 %v1622, %v1624
      %v1626 = vadd.f32 %v1622, %v1625
      %vm1627 = vweird.f32 %v956
      %vm1628 = vweird.f32 %v1622
      %vm1629 = vmor %vm1627, %vm1628
      %v1630 = vsel %vm1629, %v1622, %v1626
      %v1631 = vand.u32 2147483647, %v956
      %vm1632 = vcmp.eq.f32.partialorder %v1631, 8.507059e+37
      %v1633 = vand.u32 %v956, 2147483648
      %v1634 = vor.u32 1.1754944e-38, %v1633
      %v1635 = vsel %vm1632, %v1634, %v1630
      %v1636 = vmul.f32 1.0, %v1635
      %v1637 = vrcp.pop %v957
      %v1638 = vmul.f32 %v957, %v1637
      %v1639 = vsub.f32 1.0, %v1638
      %v1640 = vmul.f32 %v1637, %v1639
      %v1641 = vadd.f32 %v1637, %v1640
      %vm1642 = vweird.f32 %v957
      %vm1643 = vweird.f32 %v1637
      %vm1644 = vmor %vm1642, %vm1643
      %v1645 = vsel %vm1644, %v1637, %v1641
      %v1646 = vand.u32 2147483647, %v957
      %vm1647 = vcmp.eq.f32.partialorder %v1646, 8.507059e+37
      %v1648 = vand.u32 %v957, 2147483648
      %v1649 = vor.u32 1.1754944e-38, %v1648
      %v1650 = vsel %vm1647, %v1649, %v1645
      %v1651 = vmul.f32 1.0, %v1650
      %v1652 = vrcp.pop %v958
      %v1653 = vmul.f32 %v958, %v1652
      %v1654 = vsub.f32 1.0, %v1653
      %v1655 = vmul.f32 %v1652, %v1654
      %v1656 = vadd.f32 %v1652, %v1655
      %vm1657 = vweird.f32 %v958
      %vm1658 = vweird.f32 %v1652
      %vm1659 = vmor %vm1657, %vm1658
      %v1660 = vsel %vm1659, %v1652, %v1656
      %v1661 = vand.u32 2147483647, %v958
      %vm1662 = vcmp.eq.f32.partialorder %v1661, 8.507059e+37
      %v1663 = vand.u32 %v958, 2147483648
      %v1664 = vor.u32 1.1754944e-38, %v1663
      %v1665 = vsel %vm1662, %v1664, %v1660
      %v1666 = vmul.f32 1.0, %v1665
      %v1667 = vrcp.pop %v959
      %v1668 = vmul.f32 %v959, %v1667
      %v1669 = vsub.f32 1.0, %v1668
      %v1670 = vmul.f32 %v1667, %v1669
      %v1671 = vadd.f32 %v1667, %v1670
      %vm1672 = vweird.f32 %v959
      %vm1673 = vweird.f32 %v1667
      %vm1674 = vmor %vm1672, %vm1673
      %v1675 = vsel %vm1674, %v1667, %v1671
      %v1676 = vand.u32 2147483647, %v959
      %vm1677 = vcmp.eq.f32.partialorder %v1676, 8.507059e+37
      %v1678 = vand.u32 %v959, 2147483648
      %v1679 = vor.u32 1.1754944e-38, %v1678
      %v1680 = vsel %vm1677, %v1679, %v1675
      %v1681 = vmul.f32 1.0, %v1680
      %v1682 = vrcp.pop %v960
      %v1683 = vmul.f32 %v960, %v1682
      %v1684 = vsub.f32 1.0, %v1683
      %v1685 = vmul.f32 %v1682, %v1684
      %v1686 = vadd.f32 %v1682, %v1685
      %vm1687 = vweird.f32 %v960
      %vm1688 = vweird.f32 %v1682
      %vm1689 = vmor %vm1687, %vm1688
      %v1690 = vsel %vm1689, %v1682, %v1686
      %v1691 = vand.u32 2147483647, %v960
      %vm1692 = vcmp.eq.f32.partialorder %v1691, 8.507059e+37
      %v1693 = vand.u32 %v960, 2147483648
      %v1694 = vor.u32 1.1754944e-38, %v1693
      %v1695 = vsel %vm1692, %v1694, %v1690
      %v1696 = vmul.f32 1.0, %v1695
      %v1697 = vrcp.pop %v961
      %v1698 = vmul.f32 %v961, %v1697
      %v1699 = vsub.f32 1.0, %v1698
      %v1700 = vmul.f32 %v1697, %v1699
      %v1701 = vadd.f32 %v1697, %v1700
      %vm1702 = vweird.f32 %v961
      %vm1703 = vweird.f32 %v1697
      %vm1704 = vmor %vm1702, %vm1703
      %v1705 = vsel %vm1704, %v1697, %v1701
      %v1706 = vand.u32 2147483647, %v961
      %vm1707 = vcmp.eq.f32.partialorder %v1706, 8.507059e+37
      %v1708 = vand.u32 %v961, 2147483648
      %v1709 = vor.u32 1.1754944e-38, %v1708
      %v1710 = vsel %vm1707, %v1709, %v1705
      %v1711 = vmul.f32 1.0, %v1710
      %v1712 = vrcp.pop %v962
      %v1713 = vmul.f32 %v962, %v1712
      %v1714 = vsub.f32 1.0, %v1713
      %v1715 = vmul.f32 %v1712, %v1714
      %v1716 = vadd.f32 %v1712, %v1715
      %vm1717 = vweird.f32 %v962
      %vm1718 = vweird.f32 %v1712
      %vm1719 = vmor %vm1717, %vm1718
      %v1720 = vsel %vm1719, %v1712, %v1716
      %v1721 = vand.u32 2147483647, %v962
      %vm1722 = vcmp.eq.f32.partialorder %v1721, 8.507059e+37
      %v1723 = vand.u32 %v962, 2147483648
      %v1724 = vor.u32 1.1754944e-38, %v1723
      %v1725 = vsel %vm1722, %v1724, %v1720
      %v1726 = vmul.f32 1.0, %v1725
      %v1727 = vrcp.pop %v963
      %v1728 = vmul.f32 %v963, %v1727
      %v1729 = vsub.f32 1.0, %v1728
      %v1730 = vmul.f32 %v1727, %v1729
      %v1731 = vadd.f32 %v1727, %v1730
      %vm1732 = vweird.f32 %v963
      %vm1733 = vweird.f32 %v1727
      %vm1734 = vmor %vm1732, %vm1733
      %v1735 = vsel %vm1734, %v1727, %v1731
      %v1736 = vand.u32 2147483647, %v963
      %vm1737 = vcmp.eq.f32.partialorder %v1736, 8.507059e+37
      %v1738 = vand.u32 %v963, 2147483648
      %v1739 = vor.u32 1.1754944e-38, %v1738
      %v1740 = vsel %vm1737, %v1739, %v1735
      %v1741 = vmul.f32 1.0, %v1740
      %v1742 = vrcp.pop %v964
      %v1743 = vmul.f32 %v964, %v1742
      %v1744 = vsub.f32 1.0, %v1743
      %v1745 = vmul.f32 %v1742, %v1744
      %v1746 = vadd.f32 %v1742, %v1745
      %vm1747 = vweird.f32 %v964
      %vm1748 = vweird.f32 %v1742
      %vm1749 = vmor %vm1747, %vm1748
      %v1750 = vsel %vm1749, %v1742, %v1746
      %v1751 = vand.u32 2147483647, %v964
      %vm1752 = vcmp.eq.f32.partialorder %v1751, 8.507059e+37
      %v1753 = vand.u32 %v964, 2147483648
      %v1754 = vor.u32 1.1754944e-38, %v1753
      %v1755 = vsel %vm1752, %v1754, %v1750
      %v1756 = vmul.f32 1.0, %v1755
      %v1757 = vrcp.pop %v965
      %v1758 = vmul.f32 %v965, %v1757
      %v1759 = vsub.f32 1.0, %v1758
      %v1760 = vmul.f32 %v1757, %v1759
      %v1761 = vadd.f32 %v1757, %v1760
      %vm1762 = vweird.f32 %v965
      %vm1763 = vweird.f32 %v1757
      %vm1764 = vmor %vm1762, %vm1763
      %v1765 = vsel %vm1764, %v1757, %v1761
      %v1766 = vand.u32 2147483647, %v965
      %vm1767 = vcmp.eq.f32.partialorder %v1766, 8.507059e+37
      %v1768 = vand.u32 %v965, 2147483648
      %v1769 = vor.u32 1.1754944e-38, %v1768
      %v1770 = vsel %vm1767, %v1769, %v1765
      %v1771 = vmul.f32 1.0, %v1770
      %v1772 = vrcp.pop %v966
      %v1773 = vmul.f32 %v966, %v1772
      %v1774 = vsub.f32 1.0, %v1773
      %v1775 = vmul.f32 %v1772, %v1774
      %v1776 = vadd.f32 %v1772, %v1775
      %vm1777 = vweird.f32 %v966
      %vm1778 = vweird.f32 %v1772
      %vm1779 = vmor %vm1777, %vm1778
      %v1780 = vsel %vm1779, %v1772, %v1776
      %v1781 = vand.u32 2147483647, %v966
      %vm1782 = vcmp.eq.f32.partialorder %v1781, 8.507059e+37
      %v1783 = vand.u32 %v966, 2147483648
      %v1784 = vor.u32 1.1754944e-38, %v1783
      %v1785 = vsel %vm1782, %v1784, %v1780
      %v1786 = vmul.f32 1.0, %v1785
      %v1787 = vrcp.pop %v967
      %v1788 = vmul.f32 %v967, %v1787
      %v1789 = vsub.f32 1.0, %v1788
      %v1790 = vmul.f32 %v1787, %v1789
      %v1791 = vadd.f32 %v1787, %v1790
      %vm1792 = vweird.f32 %v967
      %vm1793 = vweird.f32 %v1787
      %vm1794 = vmor %vm1792, %vm1793
      %v1795 = vsel %vm1794, %v1787, %v1791
      %v1796 = vand.u32 2147483647, %v967
      %vm1797 = vcmp.eq.f32.partialorder %v1796, 8.507059e+37
      %v1798 = vand.u32 %v967, 2147483648
      %v1799 = vor.u32 1.1754944e-38, %v1798
      %v1800 = vsel %vm1797, %v1799, %v1795
      %v1801 = vmul.f32 1.0, %v1800
      %v1802 = vrcp.pop %v968
      %v1803 = vmul.f32 %v968, %v1802
      %v1804 = vsub.f32 1.0, %v1803
      %v1805 = vmul.f32 %v1802, %v1804
      %v1806 = vadd.f32 %v1802, %v1805
      %vm1807 = vweird.f32 %v968
      %vm1808 = vweird.f32 %v1802
      %vm1809 = vmor %vm1807, %vm1808
      %v1810 = vsel %vm1809, %v1802, %v1806
      %v1811 = vand.u32 2147483647, %v968
      %vm1812 = vcmp.eq.f32.partialorder %v1811, 8.507059e+37
      %v1813 = vand.u32 %v968, 2147483648
      %v1814 = vor.u32 1.1754944e-38, %v1813
      %v1815 = vsel %vm1812, %v1814, %v1810
      %v1816 = vmul.f32 1.0, %v1815
      %v1817 = vrcp.pop %v969
      %v1818 = vmul.f32 %v969, %v1817
      %v1819 = vsub.f32 1.0, %v1818
      %v1820 = vmul.f32 %v1817, %v1819
      %v1821 = vadd.f32 %v1817, %v1820
      %vm1822 = vweird.f32 %v969
      %vm1823 = vweird.f32 %v1817
      %vm1824 = vmor %vm1822, %vm1823
      %v1825 = vsel %vm1824, %v1817, %v1821
      %v1826 = vand.u32 2147483647, %v969
      %vm1827 = vcmp.eq.f32.partialorder %v1826, 8.507059e+37
      %v1828 = vand.u32 %v969, 2147483648
      %v1829 = vor.u32 1.1754944e-38, %v1828
      %v1830 = vsel %vm1827, %v1829, %v1825
      %v1831 = vmul.f32 1.0, %v1830
      %v1832 = vrcp.pop %v970
      %v1833 = vmul.f32 %v970, %v1832
      %v1834 = vsub.f32 1.0, %v1833
      %v1835 = vmul.f32 %v1832, %v1834
      %v1836 = vadd.f32 %v1832, %v1835
      %vm1837 = vweird.f32 %v970
      %vm1838 = vweird.f32 %v1832
      %vm1839 = vmor %vm1837, %vm1838
      %v1840 = vsel %vm1839, %v1832, %v1836
      %v1841 = vand.u32 2147483647, %v970
      %vm1842 = vcmp.eq.f32.partialorder %v1841, 8.507059e+37
      %v1843 = vand.u32 %v970, 2147483648
      %v1844 = vor.u32 1.1754944e-38, %v1843
      %v1845 = vsel %vm1842, %v1844, %v1840
      %v1846 = vmul.f32 1.0, %v1845
      %v1847 = vrcp.pop %v971
      %v1848 = vmul.f32 %v971, %v1847
      %v1849 = vsub.f32 1.0, %v1848
      %v1850 = vmul.f32 %v1847, %v1849
      %v1851 = vadd.f32 %v1847, %v1850
      %vm1852 = vweird.f32 %v971
      %vm1853 = vweird.f32 %v1847
      %vm1854 = vmor %vm1852, %vm1853
      %v1855 = vsel %vm1854, %v1847, %v1851
      %v1856 = vand.u32 2147483647, %v971
      %vm1857 = vcmp.eq.f32.partialorder %v1856, 8.507059e+37
      %v1858 = vand.u32 %v971, 2147483648
      %v1859 = vor.u32 1.1754944e-38, %v1858
      %v1860 = vsel %vm1857, %v1859, %v1855
      %v1861 = vmul.f32 1.0, %v1860
      %v1862 = vrcp.pop %v972
      %v1863 = vmul.f32 %v972, %v1862
      %v1864 = vsub.f32 1.0, %v1863
      %v1865 = vmul.f32 %v1862, %v1864
      %v1866 = vadd.f32 %v1862, %v1865
      %vm1867 = vweird.f32 %v972
      %vm1868 = vweird.f32 %v1862
      %vm1869 = vmor %vm1867, %vm1868
      %v1870 = vsel %vm1869, %v1862, %v1866
      %v1871 = vand.u32 2147483647, %v972
      %vm1872 = vcmp.eq.f32.partialorder %v1871, 8.507059e+37
      %v1873 = vand.u32 %v972, 2147483648
      %v1874 = vor.u32 1.1754944e-38, %v1873
      %v1875 = vsel %vm1872, %v1874, %v1870
      %v1876 = vmul.f32 1.0, %v1875
      %v1877 = vrcp.pop %v973
      %v1878 = vmul.f32 %v973, %v1877
      %v1879 = vsub.f32 1.0, %v1878
      %v1880 = vmul.f32 %v1877, %v1879
      %v1881 = vadd.f32 %v1877, %v1880
      %vm1882 = vweird.f32 %v973
      %vm1883 = vweird.f32 %v1877
      %vm1884 = vmor %vm1882, %vm1883
      %v1885 = vsel %vm1884, %v1877, %v1881
      %v1886 = vand.u32 2147483647, %v973
      %vm1887 = vcmp.eq.f32.partialorder %v1886, 8.507059e+37
      %v1888 = vand.u32 %v973, 2147483648
      %v1889 = vor.u32 1.1754944e-38, %v1888
      %v1890 = vsel %vm1887, %v1889, %v1885
      %v1891 = vmul.f32 1.0, %v1890
      %v1892 = vrcp.pop %v974
      %v1893 = vmul.f32 %v974, %v1892
      %v1894 = vsub.f32 1.0, %v1893
      %v1895 = vmul.f32 %v1892, %v1894
      %v1896 = vadd.f32 %v1892, %v1895
      %vm1897 = vweird.f32 %v974
      %vm1898 = vweird.f32 %v1892
      %vm1899 = vmor %vm1897, %vm1898
      %v1900 = vsel %vm1899, %v1892, %v1896
      %v1901 = vand.u32 2147483647, %v974
      %vm1902 = vcmp.eq.f32.partialorder %v1901, 8.507059e+37
      %v1903 = vand.u32 %v974, 2147483648
      %v1904 = vor.u32 1.1754944e-38, %v1903
      %v1905 = vsel %vm1902, %v1904, %v1900
      %v1906 = vmul.f32 1.0, %v1905
      %v1907 = vrcp.pop %v975
      %v1908 = vmul.f32 %v975, %v1907
      %v1909 = vsub.f32 1.0, %v1908
      %v1910 = vmul.f32 %v1907, %v1909
      %v1911 = vadd.f32 %v1907, %v1910
      %vm1912 = vweird.f32 %v975
      %vm1913 = vweird.f32 %v1907
      %vm1914 = vmor %vm1912, %vm1913
      %v1915 = vsel %vm1914, %v1907, %v1911
      %v1916 = vand.u32 2147483647, %v975
      %vm1917 = vcmp.eq.f32.partialorder %v1916, 8.507059e+37
      %v1918 = vand.u32 %v975, 2147483648
      %v1919 = vor.u32 1.1754944e-38, %v1918
      %v1920 = vsel %vm1917, %v1919, %v1915
      %v1921 = vmul.f32 1.0, %v1920
      %v1922 = vrcp.pop %v976
      %v1923 = vmul.f32 %v976, %v1922
      %v1924 = vsub.f32 1.0, %v1923
      %v1925 = vmul.f32 %v1922, %v1924
      %v1926 = vadd.f32 %v1922, %v1925
      %vm1927 = vweird.f32 %v976
      %vm1928 = vweird.f32 %v1922
      %vm1929 = vmor %vm1927, %vm1928
      %v1930 = vsel %vm1929, %v1922, %v1926
      %v1931 = vand.u32 2147483647, %v976
      %vm1932 = vcmp.eq.f32.partialorder %v1931, 8.507059e+37
      %v1933 = vand.u32 %v976, 2147483648
      %v1934 = vor.u32 1.1754944e-38, %v1933
      %v1935 = vsel %vm1932, %v1934, %v1930
      %v1936 = vmul.f32 1.0, %v1935
      %v1937 = vmul.f32 %v562, %v991
      %v1938 = vmul.f32 %v564, %v1006
      %v1939 = vmul.f32 %v567, %v1021
      %v1940 = vmul.f32 %v569, %v1036
      %v1941 = vmul.f32 %v572, %v1051
      %v1942 = vmul.f32 %v574, %v1066
      %v1943 = vmul.f32 %v577, %v1081
      %v1944 = vmul.f32 %v579, %v1096
      %v1945 = vmul.f32 %v582, %v1111
      %v1946 = vmul.f32 %v584, %v1126
      %v1947 = vmul.f32 %v587, %v1141
      %v1948 = vmul.f32 %v589, %v1156
      %v1949 = vmul.f32 %v592, %v1171
      %v1950 = vmul.f32 %v594, %v1186
      %v1951 = vmul.f32 %v597, %v1201
      %v1952 = vmul.f32 %v599, %v1216
      %v1953 = vmul.f32 %v602, %v1231
      %v1954 = vmul.f32 %v604, %v1246
      %v1955 = vmul.f32 %v607, %v1261
      %v1956 = vmul.f32 %v609, %v1276
      %v1957 = vmul.f32 %v612, %v1291
      %v1958 = vmul.f32 %v614, %v1306
      %v1959 = vmul.f32 %v617, %v1321
      %v1960 = vmul.f32 %v619, %v1336
      %v1961 = vmul.f32 %v622, %v1351
      %v1962 = vmul.f32 %v624, %v1366
      %v1963 = vmul.f32 %v627, %v1381
      %v1964 = vmul.f32 %v629, %v1396
      %v1965 = vmul.f32 %v632, %v1411
      %v1966 = vmul.f32 %v634, %v1426
      %v1967 = vmul.f32 %v637, %v1441
      %v1968 = vmul.f32 %v639, %v1456
      %v1969 = vmul.f32 %v642, %v1471
      %v1970 = vmul.f32 %v644, %v1486
      %v1971 = vmul.f32 %v647, %v1501
      %v1972 = vmul.f32 %v649, %v1516
      %v1973 = vmul.f32 %v652, %v1531
      %v1974 = vmul.f32 %v654, %v1546
      %v1975 = vmul.f32 %v657, %v1561
      %v1976 = vmul.f32 %v659, %v1576
      %v1977 = vmul.f32 %v662, %v1591
      %v1978 = vmul.f32 %v664, %v1606
      %v1979 = vmul.f32 %v667, %v1621
      %v1980 = vmul.f32 %v669, %v1636
      %v1981 = vmul.f32 %v672, %v1651
      %v1982 = vmul.f32 %v674, %v1666
      %v1983 = vmul.f32 %v677, %v1681
      %v1984 = vmul.f32 %v679, %v1696
      %v1985 = vmul.f32 %v682, %v1711
      %v1986 = vmul.f32 %v684, %v1726
      %v1987 = vmul.f32 %v687, %v1741
      %v1988 = vmul.f32 %v689, %v1756
      %v1989 = vmul.f32 %v692, %v1771
      %v1990 = vmul.f32 %v694, %v1786
      %v1991 = vmul.f32 %v697, %v1801
      %v1992 = vmul.f32 %v699, %v1816
      %v1993 = vmul.f32 %v702, %v1831
      %v1994 = vmul.f32 %v704, %v1846
      %v1995 = vmul.f32 %v707, %v1861
      %v1996 = vmul.f32 %v709, %v1876
      %v1997 = vmul.f32 %v712, %v1891
      %v1998 = vmul.f32 %v714, %v1906
      %v1999 = vmul.f32 %v717, %v1921
      %v2000 = vmul.f32 %v719, %v1936
      %v2001 = vpack.c.bf16 %v1937, %v1937
      %v2002 = vpack.c.bf16 %v1938, %v1938
      %v2003 = vpack.c.bf16 %v1939, %v1939
      %v2004 = vpack.c.bf16 %v1940, %v1940
      %v2005 = vpack.c.bf16 %v1941, %v1941
      %v2006 = vpack.c.bf16 %v1942, %v1942
      %v2007 = vpack.c.bf16 %v1943, %v1943
      %v2008 = vpack.c.bf16 %v1944, %v1944
      %v2009 = vpack.c.bf16 %v1945, %v1945
      %v2010 = vpack.c.bf16 %v1946, %v1946
      %v2011 = vpack.c.bf16 %v1947, %v1947
      %v2012 = vpack.c.bf16 %v1948, %v1948
      %v2013 = vpack.c.bf16 %v1949, %v1949
      %v2014 = vpack.c.bf16 %v1950, %v1950
      %v2015 = vpack.c.bf16 %v1951, %v1951
      %v2016 = vpack.c.bf16 %v1952, %v1952
      %v2017 = vpack.c.bf16 %v1953, %v1953
      %v2018 = vpack.c.bf16 %v1954, %v1954
      %v2019 = vpack.c.bf16 %v1955, %v1955
      %v2020 = vpack.c.bf16 %v1956, %v1956
      %v2021 = vpack.c.bf16 %v1957, %v1957
      %v2022 = vpack.c.bf16 %v1958, %v1958
      %v2023 = vpack.c.bf16 %v1959, %v1959
      %v2024 = vpack.c.bf16 %v1960, %v1960
      %v2025 = vpack.c.bf16 %v1961, %v1961
      %v2026 = vpack.c.bf16 %v1962, %v1962
      %v2027 = vpack.c.bf16 %v1963, %v1963
      %v2028 = vpack.c.bf16 %v1964, %v1964
      %v2029 = vpack.c.bf16 %v1965, %v1965
      %v2030 = vpack.c.bf16 %v1966, %v1966
      %v2031 = vpack.c.bf16 %v1967, %v1967
      %v2032 = vpack.c.bf16 %v1968, %v1968
      %v2033 = vpack.c.bf16 %v1969, %v1969
      %v2034 = vpack.c.bf16 %v1970, %v1970
      %v2035 = vpack.c.bf16 %v1971, %v1971
      %v2036 = vpack.c.bf16 %v1972, %v1972
      %v2037 = vpack.c.bf16 %v1973, %v1973
      %v2038 = vpack.c.bf16 %v1974, %v1974
      %v2039 = vpack.c.bf16 %v1975, %v1975
      %v2040 = vpack.c.bf16 %v1976, %v1976
      %v2041 = vpack.c.bf16 %v1977, %v1977
      %v2042 = vpack.c.bf16 %v1978, %v1978
      %v2043 = vpack.c.bf16 %v1979, %v1979
      %v2044 = vpack.c.bf16 %v1980, %v1980
      %v2045 = vpack.c.bf16 %v1981, %v1981
      %v2046 = vpack.c.bf16 %v1982, %v1982
      %v2047 = vpack.c.bf16 %v1983, %v1983
      %v2048 = vpack.c.bf16 %v1984, %v1984
      %v2049 = vpack.c.bf16 %v1985, %v1985
      %v2050 = vpack.c.bf16 %v1986, %v1986
      %v2051 = vpack.c.bf16 %v1987, %v1987
      %v2052 = vpack.c.bf16 %v1988, %v1988
      %v2053 = vpack.c.bf16 %v1989, %v1989
      %v2054 = vpack.c.bf16 %v1990, %v1990
      %v2055 = vpack.c.bf16 %v1991, %v1991
      %v2056 = vpack.c.bf16 %v1992, %v1992
      %v2057 = vpack.c.bf16 %v1993, %v1993
      %v2058 = vpack.c.bf16 %v1994, %v1994
      %v2059 = vpack.c.bf16 %v1995, %v1995
      %v2060 = vpack.c.bf16 %v1996, %v1996
      %v2061 = vpack.c.bf16 %v1997, %v1997
      %v2062 = vpack.c.bf16 %v1998, %v1998
      %v2063 = vpack.c.bf16 %v1999, %v1999
      %v2064 = vpack.c.bf16 %v2000, %v2000
      %vm2065 = vcmask 519168
      %2066 = vst.msk [vmem:[%s208] sm:$0xf] %vm2065, %v2001
      %2067 = vst.msk [vmem:[%s208 + $0x4] sm:$0xf] %vm2065, %v2002
      %2068 = vst.msk [vmem:[%s208 + $0x8] sm:$0xf] %vm2065, %v2003
      %2069 = vst.msk [vmem:[%s208 + $0xc] sm:$0xf] %vm2065, %v2004
      %2070 = vst.msk [vmem:[%s208 + $0x10] sm:$0xf] %vm2065, %v2005
      %2071 = vst.msk [vmem:[%s208 + $0x14] sm:$0xf] %vm2065, %v2006
      %2072 = vst.msk [vmem:[%s208 + $0x18] sm:$0xf] %vm2065, %v2007
      %2073 = vst.msk [vmem:[%s208 + $0x1c] sm:$0xf] %vm2065, %v2008
      %2074 = vst.msk [vmem:[%s208 + $0x20] sm:$0xf] %vm2065, %v2009
      %2075 = vst.msk [vmem:[%s208 + $0x24] sm:$0xf] %vm2065, %v2010
      %2076 = vst.msk [vmem:[%s208 + $0x28] sm:$0xf] %vm2065, %v2011
      %2077 = vst.msk [vmem:[%s208 + $0x2c] sm:$0xf] %vm2065, %v2012
      %2078 = vst.msk [vmem:[%s208 + $0x30] sm:$0xf] %vm2065, %v2013
      %2079 = vst.msk [vmem:[%s208 + $0x34] sm:$0xf] %vm2065, %v2014
      %2080 = vst.msk [vmem:[%s208 + $0x38] sm:$0xf] %vm2065, %v2015
      %2081 = vst.msk [vmem:[%s208 + $0x3c] sm:$0xf] %vm2065, %v2016
      %2082 = vst.msk [vmem:[%s208 + $0x40] sm:$0xf] %vm2065, %v2017
      %2083 = vst.msk [vmem:[%s208 + $0x44] sm:$0xf] %vm2065, %v2018
      %2084 = vst.msk [vmem:[%s208 + $0x48] sm:$0xf] %vm2065, %v2019
      %2085 = vst.msk [vmem:[%s208 + $0x4c] sm:$0xf] %vm2065, %v2020
      %2086 = vst.msk [vmem:[%s208 + $0x50] sm:$0xf] %vm2065, %v2021
      %2087 = vst.msk [vmem:[%s208 + $0x54] sm:$0xf] %vm2065, %v2022
      %2088 = vst.msk [vmem:[%s208 + $0x58] sm:$0xf] %vm2065, %v2023
      %2089 = vst.msk [vmem:[%s208 + $0x5c] sm:$0xf] %vm2065, %v2024
      %2090 = vst.msk [vmem:[%s208 + $0x60] sm:$0xf] %vm2065, %v2025
      %2091 = vst.msk [vmem:[%s208 + $0x64] sm:$0xf] %vm2065, %v2026
      %2092 = vst.msk [vmem:[%s208 + $0x68] sm:$0xf] %vm2065, %v2027
      %2093 = vst.msk [vmem:[%s208 + $0x6c] sm:$0xf] %vm2065, %v2028
      %2094 = vst.msk [vmem:[%s208 + $0x70] sm:$0xf] %vm2065, %v2029
      %2095 = vst.msk [vmem:[%s208 + $0x74] sm:$0xf] %vm2065, %v2030
      %2096 = vst.msk [vmem:[%s208 + $0x78] sm:$0xf] %vm2065, %v2031
      %2097 = vst.msk [vmem:[%s208 + $0x7c] sm:$0xf] %vm2065, %v2032
      %2098 = vst.msk [vmem:[%s208 + $0x80] sm:$0xf] %vm2065, %v2033
      %2099 = vst.msk [vmem:[%s208 + $0x84] sm:$0xf] %vm2065, %v2034
      %2100 = vst.msk [vmem:[%s208 + $0x88] sm:$0xf] %vm2065, %v2035
      %2101 = vst.msk [vmem:[%s208 + $0x8c] sm:$0xf] %vm2065, %v2036
      %2102 = vst.msk [vmem:[%s208 + $0x90] sm:$0xf] %vm2065, %v2037
      %2103 = vst.msk [vmem:[%s208 + $0x94] sm:$0xf] %vm2065, %v2038
      %2104 = vst.msk [vmem:[%s208 + $0x98] sm:$0xf] %vm2065, %v2039
      %2105 = vst.msk [vmem:[%s208 + $0x9c] sm:$0xf] %vm2065, %v2040
      %2106 = vst.msk [vmem:[%s208 + $0xa0] sm:$0xf] %vm2065, %v2041
      %2107 = vst.msk [vmem:[%s208 + $0xa4] sm:$0xf] %vm2065, %v2042
      %2108 = vst.msk [vmem:[%s208 + $0xa8] sm:$0xf] %vm2065, %v2043
      %2109 = vst.msk [vmem:[%s208 + $0xac] sm:$0xf] %vm2065, %v2044
      %2110 = vst.msk [vmem:[%s208 + $0xb0] sm:$0xf] %vm2065, %v2045
      %2111 = vst.msk [vmem:[%s208 + $0xb4] sm:$0xf] %vm2065, %v2046
      %2112 = vst.msk [vmem:[%s208 + $0xb8] sm:$0xf] %vm2065, %v2047
      %2113 = vst.msk [vmem:[%s208 + $0xbc] sm:$0xf] %vm2065, %v2048
      %2114 = vst.msk [vmem:[%s208 + $0xc0] sm:$0xf] %vm2065, %v2049
      %2115 = vst.msk [vmem:[%s208 + $0xc4] sm:$0xf] %vm2065, %v2050
      %2116 = vst.msk [vmem:[%s208 + $0xc8] sm:$0xf] %vm2065, %v2051
      %2117 = vst.msk [vmem:[%s208 + $0xcc] sm:$0xf] %vm2065, %v2052
      %2118 = vst.msk [vmem:[%s208 + $0xd0] sm:$0xf] %vm2065, %v2053
      %2119 = vst.msk [vmem:[%s208 + $0xd4] sm:$0xf] %vm2065, %v2054
      %2120 = vst.msk [vmem:[%s208 + $0xd8] sm:$0xf] %vm2065, %v2055
      %2121 = vst.msk [vmem:[%s208 + $0xdc] sm:$0xf] %vm2065, %v2056
      %2122 = vst.msk [vmem:[%s208 + $0xe0] sm:$0xf] %vm2065, %v2057
      %2123 = vst.msk [vmem:[%s208 + $0xe4] sm:$0xf] %vm2065, %v2058
      %2124 = vst.msk [vmem:[%s208 + $0xe8] sm:$0xf] %vm2065, %v2059
      %2125 = vst.msk [vmem:[%s208 + $0xec] sm:$0xf] %vm2065, %v2060
      %2126 = vst.msk [vmem:[%s208 + $0xf0] sm:$0xf] %vm2065, %v2061
      %2127 = vst.msk [vmem:[%s208 + $0xf4] sm:$0xf] %vm2065, %v2062
      %2128 = vst.msk [vmem:[%s208 + $0xf8] sm:$0xf] %vm2065, %v2063
      %2129 = vst.msk [vmem:[%s208 + $0xfc] sm:$0xf] %vm2065, %v2064
      %s2130 = smul.u32 64, %s19
      %p2131 = scmp.lt.s32.totalorder %s18, 1
      %s2132 = scalar_select %p2131, %s18, 1
      %p2133 = scmp.lt.s32.totalorder %s2130, 127
      %s2134 = scalar_select %p2133, %s2130, 127
      %s2135 = smul.addr %s2132, 128
      %s2136 = sadd.s32 %s2134, %s2135
      %s2137 = smul.addr %s2136, 4
      %s2138 = scalar_lea.vmem %s3, %s2137
      // Predicated region
      $region33: #{tpu_custom_call.1} parent=31 // pred_check
        %p2139 = pneg %p116
      $region34: #{tpu_custom_call.1} parent=31 // pred_check_branch
        %2141 = sbr.rel (%p2139) target = $region36
      $region35: #{tpu_custom_call.1} parent=31 // pred_region
        %s2142 = smul.u32 64, %s19
      $region36: #{tpu_custom_call.1} parent=31 // pred_fallthru
        _
    $region32: #{tpu_custom_call.1} parent=5 // pred_fallthru
      _
    %p2143 = scmp.le.s32.totalorder 2, %s9
    // Predicated region
    $region37: #{tpu_custom_call.1} parent=5 // pred_check
      %p2144 = pneg %p2143
    $region38: #{tpu_custom_call.1} parent=5 // pred_check_branch
      %2146 = sbr.rel (%p2144) target = $region40
    $region39: #{tpu_custom_call.1} parent=5 // pred_region
      %s2147 = ssub.s32 %s9, 2
      // Predicated region
      $region41: #{tpu_custom_call.1} parent=39 // pred_check
        %p2148 = pneg %p122
      $region42: #{tpu_custom_call.1} parent=39 // pred_check_branch
        %2150 = sbr.rel (%p2148) target = $region44
      $region43: #{tpu_custom_call.1} parent=39 // pred_region
        %s2151 = smul.u32 64, %s21
        %p2152 = scmp.lt.s32.totalorder %s20, 1
        %s2153 = scalar_select %p2152, %s20, 1
        %p2154 = scmp.lt.s32.totalorder %s2151, 127
        %s2155 = scalar_select %p2154, %s2151, 127
        %s2156 = smul.addr %s2153, 128
        %s2157 = sadd.s32 %s2155, %s2156
        %s2158 = smul.addr %s2157, 4
        %s2159 = scalar_lea.vmem %s3, %s2158
      $region44: #{tpu_custom_call.1} parent=39 // pred_fallthru
        _
    $region40: #{tpu_custom_call.1} parent=5 // pred_fallthru
      _
  $region6: #{tpu_custom_call.1} parent=0 // loop_footer
    %s13 = sadd.s32 1, %s9
  $region7: #{tpu_custom_call.1} parent=0 // loop_footer_branch
    %8 = sbr.rel target = $region3
  $region8: #{tpu_custom_call.1} parent=0 // loop_exit
    _

</llo_original>
